<compile_context>
chip_gen: v7x
topology: tpu7x:2x2x1
jax: 0.10.0
libtpu: 0.0.40
codegen_flags: <defaults>
</compile_context>

<pallas_src>
import functools

import jax
import jax.numpy as jnp
from jax import lax
from jax.experimental import pallas as pl
from jax.experimental.pallas import tpu as pltpu


# ----------------------------------------------------------------------------
# Fused kernel: one-hot gather + input projection, LSTM recurrence, batched
# tied decoder.  Single grid point; recurrence runs in-kernel.
# ----------------------------------------------------------------------------
def _fused_rnn_kernel(tok_ref,        # (T*Bp, 1) int32  token ids (batch-padded, time-major flat)
                      tih_ref,        # (Vpad, 4H) f32   emb_pad @ W_ih + b   (gate order i,f,o,g)
                      whh_ref,        # (H, 4H) f32      W_hh                 (gate order i,f,o,g)
                      emb_ref,        # (Vpad, H) f32    tied decoder table (pad rows zero)
                      bdec_ref,       # (1, Vpad) f32    decoder bias (lane padded)
                      h0_ref, c0_ref,  # (Bp, H) f32
                      dec_ref,        # out (T*Bp, Vpad) f32
                      hT_ref, cT_ref,  # out (Bp, H) f32
                      xproj_ref,      # scratch (T*Bp, 4H) f32
                      hall_ref):      # scratch (T*Bp, H) f32
    TBp, Vpad = dec_ref.shape
    Bp, H = h0_ref.shape
    T = TBp // Bp
    H3 = 3 * H

    # ---- Phase 1 (time-parallel): embedding gather + input projection as ONE
    # one-hot MXU matmul for all timesteps.  LSTM bias is baked into tih rows.
    tok = tok_ref[...]                                              # (T*Bp, 1)
    col = lax.broadcasted_iota(jnp.int32, (TBp, Vpad), 1)
    onehot = (col == tok).astype(jnp.float32)                       # (T*Bp, Vpad)
    xproj_ref[...] = jnp.dot(onehot, tih_ref[...],
                             preferred_element_type=jnp.float32)    # (T*Bp, 4H)

    # ---- Phase 2 (serial recurrence): only h-dependent work stays in the loop.
    w_hh = whh_ref[...]                                             # hoisted, (H, 4H)

    def step(t, carry):
        h, c = carry
        r = pl.multiple_of(t * Bp, Bp)                              # 8-aligned row offset
        gates = xproj_ref[pl.ds(r, Bp), :] + jnp.dot(
            h, w_hh, preferred_element_type=jnp.float32)            # (Bp, 4H)
        # Gate order i, f, o, g: one wide sigmoid push + one tanh push.
        sg = jax.nn.sigmoid(gates[:, :H3])
        i_g = sg[:, 0 * H:1 * H]
        f_g = sg[:, 1 * H:2 * H]
        o_g = sg[:, 2 * H:H3]
        g_g = jnp.tanh(gates[:, H3:])
        c_new = f_g * c + i_g * g_g
        h_new = o_g * jnp.tanh(c_new)
        hall_ref[pl.ds(r, Bp), :] = h_new                           # aligned dense store
        return h_new, c_new

    hT, cT = lax.fori_loop(0, T, step, (h0_ref[...], c0_ref[...]),
                           unroll=min(T, 8))                        # bounded unroll
    hT_ref[...] = hT
    cT_ref[...] = cT

    # ---- Phase 3 (time-parallel): tied decoder as ONE tall matmul + one store.
    # TODO(synk): at real vocab/H sizes, tile this over a "parallel" vocab grid
    # axis (v7x: 64 MiB VMEM, 2 TCs) and cast MXU operands to bf16; irrelevant
    # at demo shapes where the full table is a few KiB.
    decoded = lax.dot_general(hall_ref[...], emb_ref[...],
                              (((1,), (1,)), ((), ())),
                              preferred_element_type=jnp.float32)   # (T*Bp, Vpad)
    dec_ref[...] = decoded + bdec_ref[...]


def fused_forward(tok_flat, table_ihb, w_hh, emb_pad, b_dec, h0, c0):
    """tok_flat: (T*Bp,1) i32; table_ihb: (Vpad,4H); w_hh: (H,4H); emb_pad: (Vpad,H);
    b_dec: (1,Vpad); h0,c0: (Bp,H)."""
    TBp = tok_flat.shape[0]
    v_pad, H = emb_pad.shape
    Bp = h0.shape[0]

    def full(shape):
        return pl.BlockSpec(shape, lambda i, _s=shape: (0,) * len(_s))

    return pl.pallas_call(
        _fused_rnn_kernel,
        out_shape=(
            jax.ShapeDtypeStruct((TBp, v_pad), jnp.float32),   # decoded (padded, flat)
            jax.ShapeDtypeStruct((Bp, H), jnp.float32),        # final h
            jax.ShapeDtypeStruct((Bp, H), jnp.float32),        # final c
        ),
        grid=(1,),                          # single grid point; recurrence is in-kernel
        in_specs=[
            full((TBp, 1)),
            full((v_pad, 4 * H)),
            full((H, 4 * H)),
            full((v_pad, H)),
            full((1, v_pad)),
            full((Bp, H)),
            full((Bp, H)),
        ],
        out_specs=(
            full((TBp, v_pad)),
            full((Bp, H)),
            full((Bp, H)),
        ),
        scratch_shapes=[
            pltpu.VMEM((TBp, 4 * H), jnp.float32),   # x_proj for all timesteps
            pltpu.VMEM((TBp, H), jnp.float32),       # all hidden states (decoder LHS)
        ],
        compiler_params=pltpu.CompilerParams(
            dimension_semantics=("arbitrary",),
            # TODO(synk): at real sizes set vmem_limit_bytes explicitly
            # (v5e default scoped VMEM is ~16 MiB).
        ),
    )(tok_flat, table_ihb, w_hh, emb_pad, b_dec, h0, c0)


# ----------------------------------------------------------------------------
# One-time (outside jit) repacking of PyTorch-layout params for the kernel.
# ----------------------------------------------------------------------------
def _perm_gates(w, H):
    # PyTorch LSTMCell gate order (i, f, g, o) -> kernel order (i, f, o, g).
    return jnp.concatenate(
        [w[:, 0:H], w[:, H:2 * H], w[:, 3 * H:4 * H], w[:, 2 * H:3 * H]], axis=1)


def prepare_params(params):
    H = params["w_ih"].shape[0]
    V = params["emb"].shape[0]
    v_pad = ((V + 127) // 128) * 128         # lane-pad vocab -> dense decoder store
    emb = params["emb"].astype(jnp.float32)
    emb_pad = jnp.zeros((v_pad, H), jnp.float32).at[:V].set(emb)
    w_ih = _perm_gates(params["w_ih"].astype(jnp.float32), H)
    w_hh = _perm_gates(params["w_hh"].astype(jnp.float32), H)
    b = _perm_gates(params["b_lstm"].astype(jnp.float32), H)
    # Pre-multiplied input-projection table with the LSTM bias baked per row:
    #   onehot(token) @ table_ihb == emb[token] @ W_ih + (b_ih + b_hh)
    table_ihb = emb_pad @ w_ih + b
    b_dec = jnp.zeros((1, v_pad), jnp.float32).at[:, :V].set(
        params["b_dec"].astype(jnp.float32))
    # TODO(synk): at real vocab/H, store emb_pad / table_ihb / w_hh as bf16
    # (MXU operands, f32 accumulation); no-op at demo sizes.
    return {"table_ihb": table_ihb, "w_hh": w_hh, "emb_pad": emb_pad,
            "b_dec": b_dec}


# ----------------------------------------------------------------------------
# Full model forward (eval mode, k=0)
# ----------------------------------------------------------------------------
@functools.partial(jax.jit, static_argnames=("ntoken",))
def rnn_model_forward(tokens, hidden, prep, *, ntoken):
    """tokens: (T, B) int; hidden: ((B,H), (B,H)); returns (result, (h_T, c_T))."""
    T, B = tokens.shape
    h0, c0 = hidden
    Bp = ((B + 7) // 8) * 8            # pad batch to sublane tile -> aligned slices
    pad = Bp - B
    tok_p = jnp.pad(tokens.astype(jnp.int32), ((0, 0), (0, pad)))
    h0p = jnp.pad(h0.astype(jnp.float32), ((0, pad), (0, 0)))
    c0p = jnp.pad(c0.astype(jnp.float32), ((0, pad), (0, 0)))
    dec_flat, hT, cT = fused_forward(
        tok_p.reshape(T * Bp, 1), prep["table_ihb"], prep["w_hh"],
        prep["emb_pad"], prep["b_dec"], h0p, c0p)
    # Strip batch padding and vocab lane padding (pad logits are exactly 0).
    result = dec_flat.reshape(T, Bp, -1)[:, :B, :ntoken]
    return result, (hT[:B], cT[:B])


# ----------------------------------------------------------------------------
# Pure-JAX reference (original PyTorch gate order) for verification
# ----------------------------------------------------------------------------
def reference_forward(tokens, hidden, params):
    emb = params["emb"][tokens].astype(jnp.float32)
    h, c = hidden
    H = h.shape[1]

    def step(carry, x_t):
        h, c = carry
        gates = x_t @ params["w_ih"] + h @ params["w_hh"] + params["b_lstm"][0]
        i = jax.nn.sigmoid(gates[:, 0 * H:1 * H])
        f = jax.nn.sigmoid(gates[:, 1 * H:2 * H])
        g = jnp.tanh(gates[:, 2 * H:3 * H])
        o = jax.nn.sigmoid(gates[:, 3 * H:4 * H])
        c = f * c + i * g
        h = o * jnp.tanh(c)
        return (h, c), h

    (h, c), raw = jax.lax.scan(step, (h, c), emb)
    T, B, _ = raw.shape
    dec = raw.reshape(T * B, H) @ params["emb"].T.astype(jnp.float32) + params["b_dec"][0]
    return dec.reshape(T, B, -1), (h, c)


if __name__ == "__main__":
    # Small shapes consistent with the module: seq T=8, batch B=4, ninp H=32, ntoken V=64.
    T, B, H, V = 8, 4, 32, 64
    key = jax.random.PRNGKey(0)
    k_emb, k_ih, k_hh, k_bi, k_bh, k_tok = jax.random.split(key, 6)

    initrange = 0.1
    bound = 1.0 / jnp.sqrt(H)            # PyTorch LSTMCell default init
    params = {
        # encoder / (tied) decoder weight: uniform(-0.1, 0.1) per init_weights()
        "emb":    jax.random.uniform(k_emb, (V, H), jnp.float32, -initrange, initrange),
        # LSTMCell weights, pre-transposed to (in, out); gate order i,f,g,o
        "w_ih":   jax.random.uniform(k_ih, (H, 4 * H), jnp.float32, -bound, bound),
        "w_hh":   jax.random.uniform(k_hh, (H, 4 * H), jnp.float32, -bound, bound),
        "b_lstm": (jax.random.uniform(k_bi, (1, 4 * H), jnp.float32, -bound, bound)
                   + jax.random.uniform(k_bh, (1, 4 * H), jnp.float32, -bound, bound)),
        "b_dec":  jnp.zeros((1, V), jnp.float32),   # decoder.bias.fill_(0)
    }

    tokens = jax.random.randint(k_tok, (T, B), 0, V, dtype=jnp.int32)
    hidden = (jnp.zeros((B, H), jnp.float32), jnp.zeros((B, H), jnp.float32))  # init_hidden

    prep = prepare_params(params)        # one-time repacking, outside jit
    result, (h_T, c_T) = rnn_model_forward(tokens, hidden, prep, ntoken=V)
    jax.block_until_ready((result, h_T, c_T))

    ref_result, (ref_h, ref_c) = reference_forward(tokens, hidden, params)
    assert result.shape == (T, B, V)
    assert jnp.allclose(result, ref_result, rtol=1e-2, atol=1e-2)
    assert jnp.allclose(h_T, ref_h, rtol=1e-2, atol=1e-2)
    assert jnp.allclose(c_T, ref_c, rtol=1e-2, atol=1e-2)

    print("KERNEL_OK")
</pallas_src>

<mosaic_0001>
module attributes {stable_mosaic.version = 11 : i64} {
  func.func @_fused_rnn_kernel(%arg0: i32, %arg1: memref<64x1xi32, #tpu.memory_space<vmem>>, %arg2: memref<128x128xf32, #tpu.memory_space<vmem>>, %arg3: memref<32x128xf32, #tpu.memory_space<vmem>>, %arg4: memref<128x32xf32, #tpu.memory_space<vmem>>, %arg5: memref<1x128xf32, #tpu.memory_space<vmem>>, %arg6: memref<8x32xf32, #tpu.memory_space<vmem>>, %arg7: memref<8x32xf32, #tpu.memory_space<vmem>>, %arg8: memref<64x128xf32, #tpu.memory_space<vmem>>, %arg9: memref<8x32xf32, #tpu.memory_space<vmem>>, %arg10: memref<8x32xf32, #tpu.memory_space<vmem>>, %arg11: memref<64x128xf32, #tpu.memory_space<vmem>>, %arg12: memref<64x32xf32, #tpu.memory_space<vmem>>) attributes {dimension_semantics = [#tpu.dimension_semantics<arbitrary>], iteration_bounds = array<i64: 1>, scalar_prefetch = 0 : i64, scratch_operands = 2 : i64, tpu.core_type = #tpu.core_type<tc>, window_params = [{pipeline_mode = #tpu.pipeline_mode<synchronous>, transform_indices = @transform_0, window_bounds = array<i64: 64, 1>}, {pipeline_mode = #tpu.pipeline_mode<synchronous>, transform_indices = @transform_1, window_bounds = array<i64: 128, 128>}, {pipeline_mode = #tpu.pipeline_mode<synchronous>, transform_indices = @transform_2, window_bounds = array<i64: 32, 128>}, {pipeline_mode = #tpu.pipeline_mode<synchronous>, transform_indices = @transform_3, window_bounds = array<i64: 128, 32>}, {pipeline_mode = #tpu.pipeline_mode<synchronous>, transform_indices = @transform_4, window_bounds = array<i64: 1, 128>}, {pipeline_mode = #tpu.pipeline_mode<synchronous>, transform_indices = @transform_5, window_bounds = array<i64: 8, 32>}, {pipeline_mode = #tpu.pipeline_mode<synchronous>, transform_indices = @transform_6, window_bounds = array<i64: 8, 32>}, {pipeline_mode = #tpu.pipeline_mode<synchronous>, transform_indices = @transform_7, window_bounds = array<i64: 64, 128>}, {pipeline_mode = #tpu.pipeline_mode<synchronous>, transform_indices = @transform_8, window_bounds = array<i64: 8, 32>}, {pipeline_mode = #tpu.pipeline_mode<synchronous>, transform_indices = @transform_9, window_bounds = array<i64: 8, 32>}]} {
    %c0 = arith.constant 0 : index
    %c0_0 = arith.constant 0 : index
    %0 = vector.load %arg1[%c0, %c0_0] : memref<64x1xi32, #tpu.memory_space<vmem>>, vector<64x1xi32>
    %1 = tpu.iota {dimensions = array<i32: 1>} : vector<64x128xi32>
    %2 = vector.broadcast %0 : vector<64x1xi32> to vector<64x128xi32>
    %3 = arith.cmpi eq, %1, %2 : vector<64x128xi32>
    %4 = arith.extui %3 : vector<64x128xi1> to vector<64x128xi32>
    %5 = arith.sitofp %4 : vector<64x128xi32> to vector<64x128xf32>
    %c0_1 = arith.constant 0 : index
    %c0_2 = arith.constant 0 : index
    %6 = vector.load %arg2[%c0_1, %c0_2] : memref<128x128xf32, #tpu.memory_space<vmem>>, vector<128x128xf32>
    %cst = arith.constant dense<0.000000e+00> : vector<64x128xf32>
    %7 = tpu.matmul %5, %6, %cst {dimension_numbers = #tpu.dot_dimension_numbers<[1], [0], [0], [1], [0, 0, 1, 1], [], []>} : vector<64x128xf32>, vector<128x128xf32>, vector<64x128xf32> -> vector<64x128xf32>
    %c0_3 = arith.constant 0 : index
    %c0_4 = arith.constant 0 : index
    %8 = vector.load %arg11[%c0_3, %c0_4] : memref<64x128xf32, #tpu.memory_space<vmem>>, vector<64x128xf32>
    tpu.vector_store %arg11[%c0_3, %c0_4], %7 {strides = array<i32>} : memref<64x128xf32, #tpu.memory_space<vmem>>, vector<64x128xf32>,
    %c0_5 = arith.constant 0 : index
    %c0_6 = arith.constant 0 : index
    %9 = vector.load %arg3[%c0_5, %c0_6] : memref<32x128xf32, #tpu.memory_space<vmem>>, vector<32x128xf32>
    %c0_7 = arith.constant 0 : index
    %c0_8 = arith.constant 0 : index
    %10 = vector.load %arg6[%c0_7, %c0_8] : memref<8x32xf32, #tpu.memory_space<vmem>>, vector<8x32xf32>
    %c0_9 = arith.constant 0 : index
    %c0_10 = arith.constant 0 : index
    %11 = vector.load %arg7[%c0_9, %c0_10] : memref<8x32xf32, #tpu.memory_space<vmem>>, vector<8x32xf32>
    %c0_i32 = arith.constant 0 : i32
    %c8_i32 = arith.constant 8 : i32
    %12 = arith.muli %c0_i32, %c8_i32 : i32
    %13 = tpu.assume_multiple %12, 8 : i32
    %14 = arith.index_cast %13 : i32 to index
    %c0_11 = arith.constant 0 : index
    %15 = vector.load %arg11[%14, %c0_11] : memref<64x128xf32, #tpu.memory_space<vmem>>, vector<8x128xf32>
    %cst_12 = arith.constant dense<0.000000e+00> : vector<8x128xf32>
    %16 = tpu.matmul %10, %9, %cst_12 {dimension_numbers = #tpu.dot_dimension_numbers<[1], [0], [0], [1], [0, 0, 1, 1], [], []>} : vector<8x32xf32>, vector<32x128xf32>, vector<8x128xf32> -> vector<8x128xf32>
    %17 = arith.addf %15, %16 : vector<8x128xf32>
    %18 = vector.extract_strided_slice %17 {offsets = [0, 0], sizes = [8, 96], strides = [1, 1]} : vector<8x128xf32> to vector<8x96xf32>
    %19 = arith.negf %18 : vector<8x96xf32>
    %20 = math.exp %19 : vector<8x96xf32>
    %cst_13 = arith.constant 1.000000e+00 : f32
    %21 = vector.broadcast %cst_13 : f32 to vector<8x96xf32>
    %22 = arith.addf %21, %20 : vector<8x96xf32>
    %23 = arith.divf %21, %22 : vector<8x96xf32>
    %24 = vector.extract_strided_slice %23 {offsets = [0, 0], sizes = [8, 32], strides = [1, 1]} : vector<8x96xf32> to vector<8x32xf32>
    %25 = vector.extract_strided_slice %23 {offsets = [0, 32], sizes = [8, 32], strides = [1, 1]} : vector<8x96xf32> to vector<8x32xf32>
    %26 = vector.extract_strided_slice %23 {offsets = [0, 64], sizes = [8, 32], strides = [1, 1]} : vector<8x96xf32> to vector<8x32xf32>
    %27 = vector.extract_strided_slice %17 {offsets = [0, 96], sizes = [8, 32], strides = [1, 1]} : vector<8x128xf32> to vector<8x32xf32>
    %28 = math.tanh %27 : vector<8x32xf32>
    %29 = arith.mulf %25, %11 : vector<8x32xf32>
    %30 = arith.mulf %24, %28 : vector<8x32xf32>
    %31 = arith.addf %29, %30 : vector<8x32xf32>
    %32 = math.tanh %31 : vector<8x32xf32>
    %33 = arith.mulf %26, %32 : vector<8x32xf32>
    %34 = arith.index_cast %13 : i32 to index
    %c0_14 = arith.constant 0 : index
    %35 = vector.load %arg12[%34, %c0_14] : memref<64x32xf32, #tpu.memory_space<vmem>>, vector<8x32xf32>
    tpu.vector_store %arg12[%34, %c0_14], %33 {strides = array<i32>} : memref<64x32xf32, #tpu.memory_space<vmem>>, vector<8x32xf32>,
    %c1_i32 = arith.constant 1 : i32
    %c8_i32_15 = arith.constant 8 : i32
    %36 = arith.muli %c1_i32, %c8_i32_15 : i32
    %37 = tpu.assume_multiple %36, 8 : i32
    %38 = arith.index_cast %37 : i32 to index
    %c0_16 = arith.constant 0 : index
    %39 = vector.load %arg11[%38, %c0_16] : memref<64x128xf32, #tpu.memory_space<vmem>>, vector<8x128xf32>
    %cst_17 = arith.constant dense<0.000000e+00> : vector<8x128xf32>
    %40 = tpu.matmul %33, %9, %cst_17 {dimension_numbers = #tpu.dot_dimension_numbers<[1], [0], [0], [1], [0, 0, 1, 1], [], []>} : vector<8x32xf32>, vector<32x128xf32>, vector<8x128xf32> -> vector<8x128xf32>
    %41 = arith.addf %39, %40 : vector<8x128xf32>
    %42 = vector.extract_strided_slice %41 {offsets = [0, 0], sizes = [8, 96], strides = [1, 1]} : vector<8x128xf32> to vector<8x96xf32>
    %43 = arith.negf %42 : vector<8x96xf32>
    %44 = math.exp %43 : vector<8x96xf32>
    %cst_18 = arith.constant 1.000000e+00 : f32
    %45 = vector.broadcast %cst_18 : f32 to vector<8x96xf32>
    %46 = arith.addf %45, %44 : vector<8x96xf32>
    %47 = arith.divf %45, %46 : vector<8x96xf32>
    %48 = vector.extract_strided_slice %47 {offsets = [0, 0], sizes = [8, 32], strides = [1, 1]} : vector<8x96xf32> to vector<8x32xf32>
    %49 = vector.extract_strided_slice %47 {offsets = [0, 32], sizes = [8, 32], strides = [1, 1]} : vector<8x96xf32> to vector<8x32xf32>
    %50 = vector.extract_strided_slice %47 {offsets = [0, 64], sizes = [8, 32], strides = [1, 1]} : vector<8x96xf32> to vector<8x32xf32>
    %51 = vector.extract_strided_slice %41 {offsets = [0, 96], sizes = [8, 32], strides = [1, 1]} : vector<8x128xf32> to vector<8x32xf32>
    %52 = math.tanh %51 : vector<8x32xf32>
    %53 = arith.mulf %49, %31 : vector<8x32xf32>
    %54 = arith.mulf %48, %52 : vector<8x32xf32>
    %55 = arith.addf %53, %54 : vector<8x32xf32>
    %56 = math.tanh %55 : vector<8x32xf32>
    %57 = arith.mulf %50, %56 : vector<8x32xf32>
    %58 = arith.index_cast %37 : i32 to index
    %c0_19 = arith.constant 0 : index
    %59 = vector.load %arg12[%58, %c0_19] : memref<64x32xf32, #tpu.memory_space<vmem>>, vector<8x32xf32>
    tpu.vector_store %arg12[%58, %c0_19], %57 {strides = array<i32>} : memref<64x32xf32, #tpu.memory_space<vmem>>, vector<8x32xf32>,
    %c2_i32 = arith.constant 2 : i32
    %c8_i32_20 = arith.constant 8 : i32
    %60 = arith.muli %c2_i32, %c8_i32_20 : i32
    %61 = tpu.assume_multiple %60, 8 : i32
    %62 = arith.index_cast %61 : i32 to index
    %c0_21 = arith.constant 0 : index
    %63 = vector.load %arg11[%62, %c0_21] : memref<64x128xf32, #tpu.memory_space<vmem>>, vector<8x128xf32>
    %cst_22 = arith.constant dense<0.000000e+00> : vector<8x128xf32>
    %64 = tpu.matmul %57, %9, %cst_22 {dimension_numbers = #tpu.dot_dimension_numbers<[1], [0], [0], [1], [0, 0, 1, 1], [], []>} : vector<8x32xf32>, vector<32x128xf32>, vector<8x128xf32> -> vector<8x128xf32>
    %65 = arith.addf %63, %64 : vector<8x128xf32>
    %66 = vector.extract_strided_slice %65 {offsets = [0, 0], sizes = [8, 96], strides = [1, 1]} : vector<8x128xf32> to vector<8x96xf32>
    %67 = arith.negf %66 : vector<8x96xf32>
    %68 = math.exp %67 : vector<8x96xf32>
    %cst_23 = arith.constant 1.000000e+00 : f32
    %69 = vector.broadcast %cst_23 : f32 to vector<8x96xf32>
    %70 = arith.addf %69, %68 : vector<8x96xf32>
    %71 = arith.divf %69, %70 : vector<8x96xf32>
    %72 = vector.extract_strided_slice %71 {offsets = [0, 0], sizes = [8, 32], strides = [1, 1]} : vector<8x96xf32> to vector<8x32xf32>
    %73 = vector.extract_strided_slice %71 {offsets = [0, 32], sizes = [8, 32], strides = [1, 1]} : vector<8x96xf32> to vector<8x32xf32>
    %74 = vector.extract_strided_slice %71 {offsets = [0, 64], sizes = [8, 32], strides = [1, 1]} : vector<8x96xf32> to vector<8x32xf32>
    %75 = vector.extract_strided_slice %65 {offsets = [0, 96], sizes = [8, 32], strides = [1, 1]} : vector<8x128xf32> to vector<8x32xf32>
    %76 = math.tanh %75 : vector<8x32xf32>
    %77 = arith.mulf %73, %55 : vector<8x32xf32>
    %78 = arith.mulf %72, %76 : vector<8x32xf32>
    %79 = arith.addf %77, %78 : vector<8x32xf32>
    %80 = math.tanh %79 : vector<8x32xf32>
    %81 = arith.mulf %74, %80 : vector<8x32xf32>
    %82 = arith.index_cast %61 : i32 to index
    %c0_24 = arith.constant 0 : index
    %83 = vector.load %arg12[%82, %c0_24] : memref<64x32xf32, #tpu.memory_space<vmem>>, vector<8x32xf32>
    tpu.vector_store %arg12[%82, %c0_24], %81 {strides = array<i32>} : memref<64x32xf32, #tpu.memory_space<vmem>>, vector<8x32xf32>,
    %c3_i32 = arith.constant 3 : i32
    %c8_i32_25 = arith.constant 8 : i32
    %84 = arith.muli %c3_i32, %c8_i32_25 : i32
    %85 = tpu.assume_multiple %84, 8 : i32
    %86 = arith.index_cast %85 : i32 to index
    %c0_26 = arith.constant 0 : index
    %87 = vector.load %arg11[%86, %c0_26] : memref<64x128xf32, #tpu.memory_space<vmem>>, vector<8x128xf32>
    %cst_27 = arith.constant dense<0.000000e+00> : vector<8x128xf32>
    %88 = tpu.matmul %81, %9, %cst_27 {dimension_numbers = #tpu.dot_dimension_numbers<[1], [0], [0], [1], [0, 0, 1, 1], [], []>} : vector<8x32xf32>, vector<32x128xf32>, vector<8x128xf32> -> vector<8x128xf32>
    %89 = arith.addf %87, %88 : vector<8x128xf32>
    %90 = vector.extract_strided_slice %89 {offsets = [0, 0], sizes = [8, 96], strides = [1, 1]} : vector<8x128xf32> to vector<8x96xf32>
    %91 = arith.negf %90 : vector<8x96xf32>
    %92 = math.exp %91 : vector<8x96xf32>
    %cst_28 = arith.constant 1.000000e+00 : f32
    %93 = vector.broadcast %cst_28 : f32 to vector<8x96xf32>
    %94 = arith.addf %93, %92 : vector<8x96xf32>
    %95 = arith.divf %93, %94 : vector<8x96xf32>
    %96 = vector.extract_strided_slice %95 {offsets = [0, 0], sizes = [8, 32], strides = [1, 1]} : vector<8x96xf32> to vector<8x32xf32>
    %97 = vector.extract_strided_slice %95 {offsets = [0, 32], sizes = [8, 32], strides = [1, 1]} : vector<8x96xf32> to vector<8x32xf32>
    %98 = vector.extract_strided_slice %95 {offsets = [0, 64], sizes = [8, 32], strides = [1, 1]} : vector<8x96xf32> to vector<8x32xf32>
    %99 = vector.extract_strided_slice %89 {offsets = [0, 96], sizes = [8, 32], strides = [1, 1]} : vector<8x128xf32> to vector<8x32xf32>
    %100 = math.tanh %99 : vector<8x32xf32>
    %101 = arith.mulf %97, %79 : vector<8x32xf32>
    %102 = arith.mulf %96, %100 : vector<8x32xf32>
    %103 = arith.addf %101, %102 : vector<8x32xf32>
    %104 = math.tanh %103 : vector<8x32xf32>
    %105 = arith.mulf %98, %104 : vector<8x32xf32>
    %106 = arith.index_cast %85 : i32 to index
    %c0_29 = arith.constant 0 : index
    %107 = vector.load %arg12[%106, %c0_29] : memref<64x32xf32, #tpu.memory_space<vmem>>, vector<8x32xf32>
    tpu.vector_store %arg12[%106, %c0_29], %105 {strides = array<i32>} : memref<64x32xf32, #tpu.memory_space<vmem>>, vector<8x32xf32>,
    %c4_i32 = arith.constant 4 : i32
    %c8_i32_30 = arith.constant 8 : i32
    %108 = arith.muli %c4_i32, %c8_i32_30 : i32
    %109 = tpu.assume_multiple %108, 8 : i32
    %110 = arith.index_cast %109 : i32 to index
    %c0_31 = arith.constant 0 : index
    %111 = vector.load %arg11[%110, %c0_31] : memref<64x128xf32, #tpu.memory_space<vmem>>, vector<8x128xf32>
    %cst_32 = arith.constant dense<0.000000e+00> : vector<8x128xf32>
    %112 = tpu.matmul %105, %9, %cst_32 {dimension_numbers = #tpu.dot_dimension_numbers<[1], [0], [0], [1], [0, 0, 1, 1], [], []>} : vector<8x32xf32>, vector<32x128xf32>, vector<8x128xf32> -> vector<8x128xf32>
    %113 = arith.addf %111, %112 : vector<8x128xf32>
    %114 = vector.extract_strided_slice %113 {offsets = [0, 0], sizes = [8, 96], strides = [1, 1]} : vector<8x128xf32> to vector<8x96xf32>
    %115 = arith.negf %114 : vector<8x96xf32>
    %116 = math.exp %115 : vector<8x96xf32>
    %cst_33 = arith.constant 1.000000e+00 : f32
    %117 = vector.broadcast %cst_33 : f32 to vector<8x96xf32>
    %118 = arith.addf %117, %116 : vector<8x96xf32>
    %119 = arith.divf %117, %118 : vector<8x96xf32>
    %120 = vector.extract_strided_slice %119 {offsets = [0, 0], sizes = [8, 32], strides = [1, 1]} : vector<8x96xf32> to vector<8x32xf32>
    %121 = vector.extract_strided_slice %119 {offsets = [0, 32], sizes = [8, 32], strides = [1, 1]} : vector<8x96xf32> to vector<8x32xf32>
    %122 = vector.extract_strided_slice %119 {offsets = [0, 64], sizes = [8, 32], strides = [1, 1]} : vector<8x96xf32> to vector<8x32xf32>
    %123 = vector.extract_strided_slice %113 {offsets = [0, 96], sizes = [8, 32], strides = [1, 1]} : vector<8x128xf32> to vector<8x32xf32>
    %124 = math.tanh %123 : vector<8x32xf32>
    %125 = arith.mulf %121, %103 : vector<8x32xf32>
    %126 = arith.mulf %120, %124 : vector<8x32xf32>
    %127 = arith.addf %125, %126 : vector<8x32xf32>
    %128 = math.tanh %127 : vector<8x32xf32>
    %129 = arith.mulf %122, %128 : vector<8x32xf32>
    %130 = arith.index_cast %109 : i32 to index
    %c0_34 = arith.constant 0 : index
    %131 = vector.load %arg12[%130, %c0_34] : memref<64x32xf32, #tpu.memory_space<vmem>>, vector<8x32xf32>
    tpu.vector_store %arg12[%130, %c0_34], %129 {strides = array<i32>} : memref<64x32xf32, #tpu.memory_space<vmem>>, vector<8x32xf32>,
    %c5_i32 = arith.constant 5 : i32
    %c8_i32_35 = arith.constant 8 : i32
    %132 = arith.muli %c5_i32, %c8_i32_35 : i32
    %133 = tpu.assume_multiple %132, 8 : i32
    %134 = arith.index_cast %133 : i32 to index
    %c0_36 = arith.constant 0 : index
    %135 = vector.load %arg11[%134, %c0_36] : memref<64x128xf32, #tpu.memory_space<vmem>>, vector<8x128xf32>
    %cst_37 = arith.constant dense<0.000000e+00> : vector<8x128xf32>
    %136 = tpu.matmul %129, %9, %cst_37 {dimension_numbers = #tpu.dot_dimension_numbers<[1], [0], [0], [1], [0, 0, 1, 1], [], []>} : vector<8x32xf32>, vector<32x128xf32>, vector<8x128xf32> -> vector<8x128xf32>
    %137 = arith.addf %135, %136 : vector<8x128xf32>
    %138 = vector.extract_strided_slice %137 {offsets = [0, 0], sizes = [8, 96], strides = [1, 1]} : vector<8x128xf32> to vector<8x96xf32>
    %139 = arith.negf %138 : vector<8x96xf32>
    %140 = math.exp %139 : vector<8x96xf32>
    %cst_38 = arith.constant 1.000000e+00 : f32
    %141 = vector.broadcast %cst_38 : f32 to vector<8x96xf32>
    %142 = arith.addf %141, %140 : vector<8x96xf32>
    %143 = arith.divf %141, %142 : vector<8x96xf32>
    %144 = vector.extract_strided_slice %143 {offsets = [0, 0], sizes = [8, 32], strides = [1, 1]} : vector<8x96xf32> to vector<8x32xf32>
    %145 = vector.extract_strided_slice %143 {offsets = [0, 32], sizes = [8, 32], strides = [1, 1]} : vector<8x96xf32> to vector<8x32xf32>
    %146 = vector.extract_strided_slice %143 {offsets = [0, 64], sizes = [8, 32], strides = [1, 1]} : vector<8x96xf32> to vector<8x32xf32>
    %147 = vector.extract_strided_slice %137 {offsets = [0, 96], sizes = [8, 32], strides = [1, 1]} : vector<8x128xf32> to vector<8x32xf32>
    %148 = math.tanh %147 : vector<8x32xf32>
    %149 = arith.mulf %145, %127 : vector<8x32xf32>
    %150 = arith.mulf %144, %148 : vector<8x32xf32>
    %151 = arith.addf %149, %150 : vector<8x32xf32>
    %152 = math.tanh %151 : vector<8x32xf32>
    %153 = arith.mulf %146, %152 : vector<8x32xf32>
    %154 = arith.index_cast %133 : i32 to index
    %c0_39 = arith.constant 0 : index
    %155 = vector.load %arg12[%154, %c0_39] : memref<64x32xf32, #tpu.memory_space<vmem>>, vector<8x32xf32>
    tpu.vector_store %arg12[%154, %c0_39], %153 {strides = array<i32>} : memref<64x32xf32, #tpu.memory_space<vmem>>, vector<8x32xf32>,
    %c6_i32 = arith.constant 6 : i32
    %c8_i32_40 = arith.constant 8 : i32
    %156 = arith.muli %c6_i32, %c8_i32_40 : i32
    %157 = tpu.assume_multiple %156, 8 : i32
    %158 = arith.index_cast %157 : i32 to index
    %c0_41 = arith.constant 0 : index
    %159 = vector.load %arg11[%158, %c0_41] : memref<64x128xf32, #tpu.memory_space<vmem>>, vector<8x128xf32>
    %cst_42 = arith.constant dense<0.000000e+00> : vector<8x128xf32>
    %160 = tpu.matmul %153, %9, %cst_42 {dimension_numbers = #tpu.dot_dimension_numbers<[1], [0], [0], [1], [0, 0, 1, 1], [], []>} : vector<8x32xf32>, vector<32x128xf32>, vector<8x128xf32> -> vector<8x128xf32>
    %161 = arith.addf %159, %160 : vector<8x128xf32>
    %162 = vector.extract_strided_slice %161 {offsets = [0, 0], sizes = [8, 96], strides = [1, 1]} : vector<8x128xf32> to vector<8x96xf32>
    %163 = arith.negf %162 : vector<8x96xf32>
    %164 = math.exp %163 : vector<8x96xf32>
    %cst_43 = arith.constant 1.000000e+00 : f32
    %165 = vector.broadcast %cst_43 : f32 to vector<8x96xf32>
    %166 = arith.addf %165, %164 : vector<8x96xf32>
    %167 = arith.divf %165, %166 : vector<8x96xf32>
    %168 = vector.extract_strided_slice %167 {offsets = [0, 0], sizes = [8, 32], strides = [1, 1]} : vector<8x96xf32> to vector<8x32xf32>
    %169 = vector.extract_strided_slice %167 {offsets = [0, 32], sizes = [8, 32], strides = [1, 1]} : vector<8x96xf32> to vector<8x32xf32>
    %170 = vector.extract_strided_slice %167 {offsets = [0, 64], sizes = [8, 32], strides = [1, 1]} : vector<8x96xf32> to vector<8x32xf32>
    %171 = vector.extract_strided_slice %161 {offsets = [0, 96], sizes = [8, 32], strides = [1, 1]} : vector<8x128xf32> to vector<8x32xf32>
    %172 = math.tanh %171 : vector<8x32xf32>
    %173 = arith.mulf %169, %151 : vector<8x32xf32>
    %174 = arith.mulf %168, %172 : vector<8x32xf32>
    %175 = arith.addf %173, %174 : vector<8x32xf32>
    %176 = math.tanh %175 : vector<8x32xf32>
    %177 = arith.mulf %170, %176 : vector<8x32xf32>
    %178 = arith.index_cast %157 : i32 to index
    %c0_44 = arith.constant 0 : index
    %179 = vector.load %arg12[%178, %c0_44] : memref<64x32xf32, #tpu.memory_space<vmem>>, vector<8x32xf32>
    tpu.vector_store %arg12[%178, %c0_44], %177 {strides = array<i32>} : memref<64x32xf32, #tpu.memory_space<vmem>>, vector<8x32xf32>,
    %c7_i32 = arith.constant 7 : i32
    %c8_i32_45 = arith.constant 8 : i32
    %180 = arith.muli %c7_i32, %c8_i32_45 : i32
    %181 = tpu.assume_multiple %180, 8 : i32
    %182 = arith.index_cast %181 : i32 to index
    %c0_46 = arith.constant 0 : index
    %183 = vector.load %arg11[%182, %c0_46] : memref<64x128xf32, #tpu.memory_space<vmem>>, vector<8x128xf32>
    %cst_47 = arith.constant dense<0.000000e+00> : vector<8x128xf32>
    %184 = tpu.matmul %177, %9, %cst_47 {dimension_numbers = #tpu.dot_dimension_numbers<[1], [0], [0], [1], [0, 0, 1, 1], [], []>} : vector<8x32xf32>, vector<32x128xf32>, vector<8x128xf32> -> vector<8x128xf32>
    %185 = arith.addf %183, %184 : vector<8x128xf32>
    %186 = vector.extract_strided_slice %185 {offsets = [0, 0], sizes = [8, 96], strides = [1, 1]} : vector<8x128xf32> to vector<8x96xf32>
    %187 = arith.negf %186 : vector<8x96xf32>
    %188 = math.exp %187 : vector<8x96xf32>
    %cst_48 = arith.constant 1.000000e+00 : f32
    %189 = vector.broadcast %cst_48 : f32 to vector<8x96xf32>
    %190 = arith.addf %189, %188 : vector<8x96xf32>
    %191 = arith.divf %189, %190 : vector<8x96xf32>
    %192 = vector.extract_strided_slice %191 {offsets = [0, 0], sizes = [8, 32], strides = [1, 1]} : vector<8x96xf32> to vector<8x32xf32>
    %193 = vector.extract_strided_slice %191 {offsets = [0, 32], sizes = [8, 32], strides = [1, 1]} : vector<8x96xf32> to vector<8x32xf32>
    %194 = vector.extract_strided_slice %191 {offsets = [0, 64], sizes = [8, 32], strides = [1, 1]} : vector<8x96xf32> to vector<8x32xf32>
    %195 = vector.extract_strided_slice %185 {offsets = [0, 96], sizes = [8, 32], strides = [1, 1]} : vector<8x128xf32> to vector<8x32xf32>
    %196 = math.tanh %195 : vector<8x32xf32>
    %197 = arith.mulf %193, %175 : vector<8x32xf32>
    %198 = arith.mulf %192, %196 : vector<8x32xf32>
    %199 = arith.addf %197, %198 : vector<8x32xf32>
    %200 = math.tanh %199 : vector<8x32xf32>
    %201 = arith.mulf %194, %200 : vector<8x32xf32>
    %202 = arith.index_cast %181 : i32 to index
    %c0_49 = arith.constant 0 : index
    %203 = vector.load %arg12[%202, %c0_49] : memref<64x32xf32, #tpu.memory_space<vmem>>, vector<8x32xf32>
    tpu.vector_store %arg12[%202, %c0_49], %201 {strides = array<i32>} : memref<64x32xf32, #tpu.memory_space<vmem>>, vector<8x32xf32>,
    %c8_i32_50 = arith.constant 8 : i32
    %c0_51 = arith.constant 0 : index
    %c0_52 = arith.constant 0 : index
    %204 = vector.load %arg9[%c0_51, %c0_52] : memref<8x32xf32, #tpu.memory_space<vmem>>, vector<8x32xf32>
    tpu.vector_store %arg9[%c0_51, %c0_52], %201 {strides = array<i32>} : memref<8x32xf32, #tpu.memory_space<vmem>>, vector<8x32xf32>,
    %c0_53 = arith.constant 0 : index
    %c0_54 = arith.constant 0 : index
    %205 = vector.load %arg10[%c0_53, %c0_54] : memref<8x32xf32, #tpu.memory_space<vmem>>, vector<8x32xf32>
    tpu.vector_store %arg10[%c0_53, %c0_54], %199 {strides = array<i32>} : memref<8x32xf32, #tpu.memory_space<vmem>>, vector<8x32xf32>,
    %c0_55 = arith.constant 0 : index
    %c0_56 = arith.constant 0 : index
    %206 = vector.load %arg12[%c0_55, %c0_56] : memref<64x32xf32, #tpu.memory_space<vmem>>, vector<64x32xf32>
    %c0_57 = arith.constant 0 : index
    %c0_58 = arith.constant 0 : index
    %207 = vector.load %arg4[%c0_57, %c0_58] : memref<128x32xf32, #tpu.memory_space<vmem>>, vector<128x32xf32>
    %cst_59 = arith.constant dense<0.000000e+00> : vector<64x128xf32>
    %208 = tpu.matmul %206, %207, %cst_59 {dimension_numbers = #tpu.dot_dimension_numbers<[1], [1], [0], [0], [0, 0, 1, 0], [], []>} : vector<64x32xf32>, vector<128x32xf32>, vector<64x128xf32> -> vector<64x128xf32>
    %c0_60 = arith.constant 0 : index
    %c0_61 = arith.constant 0 : index
    %209 = vector.load %arg5[%c0_60, %c0_61] : memref<1x128xf32, #tpu.memory_space<vmem>>, vector<1x128xf32>
    %210 = vector.broadcast %209 : vector<1x128xf32> to vector<64x128xf32>
    %211 = arith.addf %208, %210 : vector<64x128xf32>
    %c0_62 = arith.constant 0 : index
    %c0_63 = arith.constant 0 : index
    %212 = vector.load %arg8[%c0_62, %c0_63] : memref<64x128xf32, #tpu.memory_space<vmem>>, vector<64x128xf32>
    tpu.vector_store %arg8[%c0_62, %c0_63], %211 {strides = array<i32>} : memref<64x128xf32, #tpu.memory_space<vmem>>, vector<64x128xf32>,
    return
  }
  func.func @transform_0(%arg0: i32) -> (i32, i32) {
    %c0_i32 = arith.constant 0 : i32
    %c0_i32_0 = arith.constant 0 : i32
    %c0_i32_1 = arith.constant 0 : i32
    return %c0_i32, %c0_i32_0 : i32, i32
  }
  func.func @transform_1(%arg0: i32) -> (i32, i32) {
    %c0_i32 = arith.constant 0 : i32
    %c0_i32_0 = arith.constant 0 : i32
    %c0_i32_1 = arith.constant 0 : i32
    return %c0_i32, %c0_i32_0 : i32, i32
  }
  func.func @transform_2(%arg0: i32) -> (i32, i32) {
    %c0_i32 = arith.constant 0 : i32
    %c0_i32_0 = arith.constant 0 : i32
    %c0_i32_1 = arith.constant 0 : i32
    return %c0_i32, %c0_i32_0 : i32, i32
  }
  func.func @transform_3(%arg0: i32) -> (i32, i32) {
    %c0_i32 = arith.constant 0 : i32
    %c0_i32_0 = arith.constant 0 : i32
    %c0_i32_1 = arith.constant 0 : i32
    return %c0_i32, %c0_i32_0 : i32, i32
  }
  func.func @transform_4(%arg0: i32) -> (i32, i32) {
    %c0_i32 = arith.constant 0 : i32
    %c0_i32_0 = arith.constant 0 : i32
    %c0_i32_1 = arith.constant 0 : i32
    return %c0_i32, %c0_i32_0 : i32, i32
  }
  func.func @transform_5(%arg0: i32) -> (i32, i32) {
    %c0_i32 = arith.constant 0 : i32
    %c0_i32_0 = arith.constant 0 : i32
    %c0_i32_1 = arith.constant 0 : i32
    return %c0_i32, %c0_i32_0 : i32, i32
  }
  func.func @transform_6(%arg0: i32) -> (i32, i32) {
    %c0_i32 = arith.constant 0 : i32
    %c0_i32_0 = arith.constant 0 : i32
    %c0_i32_1 = arith.constant 0 : i32
    return %c0_i32, %c0_i32_0 : i32, i32
  }
  func.func @transform_7(%arg0: i32) -> (i32, i32) {
    %c0_i32 = arith.constant 0 : i32
    %c0_i32_0 = arith.constant 0 : i32
    %c0_i32_1 = arith.constant 0 : i32
    return %c0_i32, %c0_i32_0 : i32, i32
  }
  func.func @transform_8(%arg0: i32) -> (i32, i32) {
    %c0_i32 = arith.constant 0 : i32
    %c0_i32_0 = arith.constant 0 : i32
    %c0_i32_1 = arith.constant 0 : i32
    return %c0_i32, %c0_i32_0 : i32, i32
  }
  func.func @transform_9(%arg0: i32) -> (i32, i32) {
    %c0_i32 = arith.constant 0 : i32
    %c0_i32_0 = arith.constant 0 : i32
    %c0_i32_1 = arith.constant 0 : i32
    return %c0_i32, %c0_i32_0 : i32, i32
  }
}

</mosaic_0001>

<llo_original>
// kernel: rnn_model_forward.1
$region0: #{rnn_model_forward.1}
  #allocation0 [shape = 'u32[]', space=smem, size = 0x4, offset = 0x4, fixed_abs, tag = 'smem constant byte address 0x4 - core index']
  #allocation1 [shape = 'u32[144,128]{1,0:T(1,128)}', space=vmem, size = 0x12000, scoped, tag = 'internal scratch']
  #allocation2 [shape = 'f32[64,128]{1,0:T(8,128)}', space=vmem, size = 0x8000, scoped, tag = 'scratch operand']
  #allocation3 [shape = 'f32[64,32]{1,0:T(8,128)}', space=vmem, size = 0x8000, scoped, tag = 'scratch operand']
  %s0 = inlined_call_operand.vmem [shape: s32[64,1], index: 0, kind: input, shape index: {}]
  %s1 = inlined_call_operand.vmem [shape: f32[128,128], index: 1, kind: input, shape index: {}]
  %s2 = inlined_call_operand.vmem [shape: f32[32,128], index: 2, kind: input, shape index: {}]
  %s3 = inlined_call_operand.vmem [shape: f32[128,32], index: 3, kind: input, shape index: {}]
  %s4 = inlined_call_operand.vmem [shape: f32[1,128], index: 4, kind: input, shape index: {}]
  %s5 = inlined_call_operand.vmem [shape: f32[8,32], index: 5, kind: input, shape index: {}]
  %s6 = inlined_call_operand.vmem [shape: f32[8,32], index: 6, kind: input, shape index: {}]
  %s7 = inlined_call_operand.vmem [shape: f32[64,128], index: 7, kind: output, shape index: {0}]
  %s8 = inlined_call_operand.vmem [shape: f32[8,32], index: 8, kind: output, shape index: {1}]
  %s9 = inlined_call_operand.vmem [shape: f32[8,32], index: 9, kind: output, shape index: {2}]
  %10 = xla_tuple %s7, %s8, %s9
  %s11 = sld [smem:[#allocation0]]
  $region54: #{rnn_model_forward.1} parent=0
    _
  %s13 = ssub.s32 1, %s11
  %s14 = scalar_select 0, %s13, %s11
  // Predicated region
  $region2: #{rnn_model_forward.1} parent=0 // pred_check
    _
  $region3: #{rnn_model_forward.1} parent=0 // pred_check_branch
    %16 = sbr.rel (0) target = $region5
  $region4: #{rnn_model_forward.1} parent=0 // pred_region
    _
  $region5: #{rnn_model_forward.1} parent=0 // pred_fallthru
    _
  // Predicated region
  $region6: #{rnn_model_forward.1} parent=0 // pred_check
    _
  $region7: #{rnn_model_forward.1} parent=0 // pred_check_branch
    %18 = sbr.rel (0) target = $region9
  $region8: #{rnn_model_forward.1} parent=0 // pred_region
    _
  $region9: #{rnn_model_forward.1} parent=0 // pred_fallthru
    _
  // Predicated region
  $region10: #{rnn_model_forward.1} parent=0 // pred_check
    _
  $region11: #{rnn_model_forward.1} parent=0 // pred_check_branch
    %20 = sbr.rel (0) target = $region13
  $region12: #{rnn_model_forward.1} parent=0 // pred_region
    _
  $region13: #{rnn_model_forward.1} parent=0 // pred_fallthru
    _
  // Predicated region
  $region14: #{rnn_model_forward.1} parent=0 // pred_check
    _
  $region15: #{rnn_model_forward.1} parent=0 // pred_check_branch
    %22 = sbr.rel (0) target = $region17
  $region16: #{rnn_model_forward.1} parent=0 // pred_region
    _
  $region17: #{rnn_model_forward.1} parent=0 // pred_fallthru
    _
  // Predicated region
  $region18: #{rnn_model_forward.1} parent=0 // pred_check
    _
  $region19: #{rnn_model_forward.1} parent=0 // pred_check_branch
    %24 = sbr.rel (0) target = $region21
  $region20: #{rnn_model_forward.1} parent=0 // pred_region
    _
  $region21: #{rnn_model_forward.1} parent=0 // pred_fallthru
    _
  // Predicated region
  $region22: #{rnn_model_forward.1} parent=0 // pred_check
    _
  $region23: #{rnn_model_forward.1} parent=0 // pred_check_branch
    %26 = sbr.rel (0) target = $region25
  $region24: #{rnn_model_forward.1} parent=0 // pred_region
    _
  $region25: #{rnn_model_forward.1} parent=0 // pred_fallthru
    _
  // Predicated region
  $region26: #{rnn_model_forward.1} parent=0 // pred_check
    _
  $region27: #{rnn_model_forward.1} parent=0 // pred_check_branch
    %28 = sbr.rel (0) target = $region29
  $region28: #{rnn_model_forward.1} parent=0 // pred_region
    _
  $region29: #{rnn_model_forward.1} parent=0 // pred_fallthru
    _
  %v29 = vld [vmem:[%s0] sm:$0xff]
  %v30 = vld [vmem:[%s0 + $0x8] sm:$0xff]
  %v31 = vld [vmem:[%s0 + $0x10] sm:$0xff]
  %v32 = vld [vmem:[%s0 + $0x18] sm:$0xff]
  %v33 = vld [vmem:[%s0 + $0x20] sm:$0xff]
  %v34 = vld [vmem:[%s0 + $0x28] sm:$0xff]
  %v35 = vld [vmem:[%s0 + $0x30] sm:$0xff]
  %v36 = vld [vmem:[%s0 + $0x38] sm:$0xff]
  %v37 = vlaneseq
  %v38 = vand.u32 %v37, 127
  %39 = vset.pattern.permute.xlu0 0
  %40 = vperm.xlu0 %39, %v29
  %v41 = vpop.permute.xlu0 %40
  %42 = vset.pattern.permute.xlu0 0
  %43 = vperm.xlu0 %42, %v30
  %v44 = vpop.permute.xlu0 %43
  %45 = vset.pattern.permute.xlu0 0
  %46 = vperm.xlu0 %45, %v31
  %v47 = vpop.permute.xlu0 %46
  %48 = vset.pattern.permute.xlu0 0
  %49 = vperm.xlu0 %48, %v32
  %v50 = vpop.permute.xlu0 %49
  %51 = vset.pattern.permute.xlu0 0
  %52 = vperm.xlu0 %51, %v33
  %v53 = vpop.permute.xlu0 %52
  %54 = vset.pattern.permute.xlu0 0
  %55 = vperm.xlu0 %54, %v34
  %v56 = vpop.permute.xlu0 %55
  %57 = vset.pattern.permute.xlu0 0
  %58 = vperm.xlu0 %57, %v35
  %v59 = vpop.permute.xlu0 %58
  %60 = vset.pattern.permute.xlu0 0
  %61 = vperm.xlu0 %60, %v36
  %v62 = vpop.permute.xlu0 %61
  %vm63 = vcmp.eq.s32.totalorder %v38, %v41
  %vm64 = vcmp.eq.s32.totalorder %v38, %v44
  %vm65 = vcmp.eq.s32.totalorder %v38, %v47
  %vm66 = vcmp.eq.s32.totalorder %v38, %v50
  %vm67 = vcmp.eq.s32.totalorder %v38, %v53
  %vm68 = vcmp.eq.s32.totalorder %v38, %v56
  %vm69 = vcmp.eq.s32.totalorder %v38, %v59
  %vm70 = vcmp.eq.s32.totalorder %v38, %v62
  %v71 = vsel %vm63, 1, 0
  %v72 = vsel %vm64, 1, 0
  %v73 = vsel %vm65, 1, 0
  %v74 = vsel %vm66, 1, 0
  %v75 = vsel %vm67, 1, 0
  %v76 = vsel %vm68, 1, 0
  %v77 = vsel %vm69, 1, 0
  %v78 = vsel %vm70, 1, 0
  %v79 = vcvt.s32.f32 %v71
  %v80 = vcvt.s32.f32 %v72
  %v81 = vcvt.s32.f32 %v73
  %v82 = vcvt.s32.f32 %v74
  %v83 = vcvt.s32.f32 %v75
  %v84 = vcvt.s32.f32 %v76
  %v85 = vcvt.s32.f32 %v77
  %v86 = vcvt.s32.f32 %v78
  %v87 = vld [vmem:[%s1] sm:$0xff]
  %v88 = vld [vmem:[%s1 + $0x8] sm:$0xff]
  %v89 = vld [vmem:[%s1 + $0x10] sm:$0xff]
  %v90 = vld [vmem:[%s1 + $0x18] sm:$0xff]
  %v91 = vld [vmem:[%s1 + $0x20] sm:$0xff]
  %v92 = vld [vmem:[%s1 + $0x28] sm:$0xff]
  %v93 = vld [vmem:[%s1 + $0x30] sm:$0xff]
  %v94 = vld [vmem:[%s1 + $0x38] sm:$0xff]
  %v95 = vld [vmem:[%s1 + $0x40] sm:$0xff]
  %v96 = vld [vmem:[%s1 + $0x48] sm:$0xff]
  %v97 = vld [vmem:[%s1 + $0x50] sm:$0xff]
  %v98 = vld [vmem:[%s1 + $0x58] sm:$0xff]
  %v99 = vld [vmem:[%s1 + $0x60] sm:$0xff]
  %v100 = vld [vmem:[%s1 + $0x68] sm:$0xff]
  %v101 = vld [vmem:[%s1 + $0x70] sm:$0xff]
  %v102 = vld [vmem:[%s1 + $0x78] sm:$0xff]
  %103 = vmatprep.subr.mxu0 0.0
  %104 = vmatpush1.msra.mxu0 %v87
  %105 = vmatprep.subr.mxu0 0.0
  %106 = vmatpush1.msra.mxu0 %v88
  %107 = vmatprep.subr.mxu0 0.0
  %108 = vmatpush1.msra.mxu0 %v89
  %109 = vmatprep.subr.mxu0 0.0
  %110 = vmatpush1.msra.mxu0 %v90
  %111 = vmatprep.subr.mxu0 0.0
  %112 = vmatpush1.msra.mxu0 %v91
  %113 = vmatprep.subr.mxu0 0.0
  %114 = vmatpush1.msra.mxu0 %v92
  %115 = vmatprep.subr.mxu0 0.0
  %116 = vmatpush1.msra.mxu0 %v93
  %117 = vmatprep.subr.mxu0 0.0
  %118 = vmatpush1.msra.mxu0 %v94
  %119 = vmatprep.subr.mxu0 0.0
  %120 = vmatpush1.msra.mxu0 %v95
  %121 = vmatprep.subr.mxu0 0.0
  %122 = vmatpush1.msra.mxu0 %v96
  %123 = vmatprep.subr.mxu0 0.0
  %124 = vmatpush1.msra.mxu0 %v97
  %125 = vmatprep.subr.mxu0 0.0
  %126 = vmatpush1.msra.mxu0 %v98
  %127 = vmatprep.subr.mxu0 0.0
  %128 = vmatpush1.msra.mxu0 %v99
  %129 = vmatprep.subr.mxu0 0.0
  %130 = vmatpush1.msra.mxu0 %v100
  %131 = vmatprep.subr.mxu0 0.0
  %132 = vmatpush1.msra.mxu0 %v101
  %133 = vmatprep.subr.mxu0 0.0
  %134 = vmatpush1.msra.mxu0 %v102
  %135 = vmatprep.subr.mxu0 0.0
  %136 = vmatpush1.msra.mxu0 0.0
  %137 = vmatprep.subr.mxu0 0.0
  %138 = vmatpush1.msra.mxu0 0.0
  %139 = vmatprep.subr.mxu0 0.0
  %140 = vmatpush1.msra.mxu0 0.0
  %141 = vmatprep.subr.mxu0 0.0
  %142 = vmatpush1.msra.mxu0 0.0
  %143 = vmatprep.subr.mxu0 0.0
  %144 = vmatpush1.msra.mxu0 0.0
  %145 = vmatprep.subr.mxu0 0.0
  %146 = vmatpush1.msra.mxu0 0.0
  %147 = vmatprep.subr.mxu0 0.0
  %148 = vmatpush1.msra.mxu0 0.0
  %149 = vmatprep.subr.mxu0 0.0
  %150 = vmatpush1.msra.mxu0 0.0
  %151 = vmatprep.subr.mxu0 0.0
  %152 = vmatpush1.msra.mxu0 0.0
  %153 = vmatprep.subr.mxu0 0.0
  %154 = vmatpush1.msra.mxu0 0.0
  %155 = vmatprep.subr.mxu0 0.0
  %156 = vmatpush1.msra.mxu0 0.0
  %157 = vmatprep.subr.mxu0 0.0
  %158 = vmatpush1.msra.mxu0 0.0
  %159 = vmatprep.subr.mxu0 0.0
  %160 = vmatpush1.msra.mxu0 0.0
  %161 = vmatprep.subr.mxu0 0.0
  %162 = vmatpush1.msra.mxu0 0.0
  %163 = vmatprep.subr.mxu0 0.0
  %164 = vmatpush1.msra.mxu0 0.0
  %165 = vmatprep.subr.mxu0 0.0
  %166 = vmatpush1.msra.mxu0 0.0
  %167 = vmatprep.mubr.f32.mxu0 0.0
  %168 = vmatmul.mubr.f32.gmra.mrb[0].mxu0 %v79
  %v169 = vpop.f32.mrb[0].mxu0
  %v170 = vadd.f32 0.0, %v169
  %v171 = vpop.f32.mrb[0].mxu0
  %172 = vmatprep.mubr.f32.mxu0 0.0
  %173 = vmatmul.mubr.f32.gmra.mrb[0].mxu0 %v80
  %v174 = vpop.f32.mrb[0].mxu0
  %v175 = vadd.f32 0.0, %v174
  %v176 = vpop.f32.mrb[0].mxu0
  %177 = vmatprep.mubr.f32.mxu0 0.0
  %178 = vmatmul.mubr.f32.gmra.mrb[0].mxu0 %v81
  %v179 = vpop.f32.mrb[0].mxu0
  %v180 = vadd.f32 0.0, %v179
  %v181 = vpop.f32.mrb[0].mxu0
  %182 = vmatprep.mubr.f32.mxu0 0.0
  %183 = vmatmul.mubr.f32.gmra.mrb[0].mxu0 %v82
  %v184 = vpop.f32.mrb[0].mxu0
  %v185 = vadd.f32 0.0, %v184
  %v186 = vpop.f32.mrb[0].mxu0
  %187 = vmatprep.mubr.f32.mxu0 0.0
  %188 = vmatmul.mubr.f32.gmra.mrb[0].mxu0 %v83
  %v189 = vpop.f32.mrb[0].mxu0
  %v190 = vadd.f32 0.0, %v189
  %v191 = vpop.f32.mrb[0].mxu0
  %192 = vmatprep.mubr.f32.mxu0 0.0
  %193 = vmatmul.mubr.f32.gmra.mrb[0].mxu0 %v84
  %v194 = vpop.f32.mrb[0].mxu0
  %v195 = vadd.f32 0.0, %v194
  %v196 = vpop.f32.mrb[0].mxu0
  %197 = vmatprep.mubr.f32.mxu0 0.0
  %198 = vmatmul.mubr.f32.gmra.mrb[0].mxu0 %v85
  %v199 = vpop.f32.mrb[0].mxu0
  %v200 = vadd.f32 0.0, %v199
  %v201 = vpop.f32.mrb[0].mxu0
  %202 = vmatprep.mubr.f32.mxu0 0.0
  %203 = vmatmul.mubr.f32.gmra.mrb[0].mxu0 %v86
  %v204 = vpop.f32.mrb[0].mxu0
  %v205 = vadd.f32 0.0, %v204
  %v206 = vpop.f32.mrb[0].mxu0
  %207 = vdwg.mxu0
  %208 = vst [vmem:[#allocation2] sm:$0xff] %v170
  %209 = vst [vmem:[#allocation2 + $0x8] sm:$0xff] %v175
  %210 = vst [vmem:[#allocation2 + $0x10] sm:$0xff] %v180
  %211 = vst [vmem:[#allocation2 + $0x18] sm:$0xff] %v185
  %212 = vst [vmem:[#allocation2 + $0x20] sm:$0xff] %v190
  %213 = vst [vmem:[#allocation2 + $0x28] sm:$0xff] %v195
  %214 = vst [vmem:[#allocation2 + $0x30] sm:$0xff] %v200
  %215 = vst [vmem:[#allocation2 + $0x38] sm:$0xff] %v205
  %v216 = vld [vmem:[%s2] sm:$0xff]
  %v217 = vld [vmem:[%s2 + $0x8] sm:$0xff]
  %v218 = vld [vmem:[%s2 + $0x10] sm:$0xff]
  %v219 = vld [vmem:[%s2 + $0x18] sm:$0xff]
  %v220 = vld [vmem:[%s5] sm:$0xff]
  %v221 = vld [vmem:[%s6] sm:$0xff]
  %v222 = vld [vmem:[#allocation2] sm:$0xff]
  %vm223 = vcmask 261120
  %v225 = vsel %vm223, %v220, 0
  %227 = vmatprep.subr.mxu0 0.0
  %228 = vmatpush1.msra.mxu0 %v216
  %229 = vmatprep.subr.mxu0 0.0
  %230 = vmatpush1.msra.mxu0 %v217
  %231 = vmatprep.subr.mxu0 0.0
  %232 = vmatpush1.msra.mxu0 %v218
  %233 = vmatprep.subr.mxu0 0.0
  %234 = vmatpush1.msra.mxu0 %v219
  %235 = vmatprep.subr.mxu0 0.0
  %236 = vmatpush1.msra.mxu0 0.0
  %237 = vmatprep.subr.mxu0 0.0
  %238 = vmatpush1.msra.mxu0 0.0
  %239 = vmatprep.subr.mxu0 0.0
  %240 = vmatpush1.msra.mxu0 0.0
  %241 = vmatprep.subr.mxu0 0.0
  %242 = vmatpush1.msra.mxu0 0.0
  %243 = vmatprep.subr.mxu0 0.0
  %244 = vmatpush1.msra.mxu0 0.0
  %245 = vmatprep.subr.mxu0 0.0
  %246 = vmatpush1.msra.mxu0 0.0
  %247 = vmatprep.subr.mxu0 0.0
  %248 = vmatpush1.msra.mxu0 0.0
  %249 = vmatprep.subr.mxu0 0.0
  %250 = vmatpush1.msra.mxu0 0.0
  %251 = vmatprep.subr.mxu0 0.0
  %252 = vmatpush1.msra.mxu0 0.0
  %253 = vmatprep.subr.mxu0 0.0
  %254 = vmatpush1.msra.mxu0 0.0
  %255 = vmatprep.subr.mxu0 0.0
  %256 = vmatpush1.msra.mxu0 0.0
  %257 = vmatprep.subr.mxu0 0.0
  %258 = vmatpush1.msra.mxu0 0.0
  %259 = vmatprep.subr.mxu0 0.0
  %260 = vmatpush1.msra.mxu0 0.0
  %261 = vmatprep.subr.mxu0 0.0
  %262 = vmatpush1.msra.mxu0 0.0
  %263 = vmatprep.subr.mxu0 0.0
  %264 = vmatpush1.msra.mxu0 0.0
  %265 = vmatprep.subr.mxu0 0.0
  %266 = vmatpush1.msra.mxu0 0.0
  %267 = vmatprep.subr.mxu0 0.0
  %268 = vmatpush1.msra.mxu0 0.0
  %269 = vmatprep.subr.mxu0 0.0
  %270 = vmatpush1.msra.mxu0 0.0
  %271 = vmatprep.subr.mxu0 0.0
  %272 = vmatpush1.msra.mxu0 0.0
  %273 = vmatprep.subr.mxu0 0.0
  %274 = vmatpush1.msra.mxu0 0.0
  %275 = vmatprep.subr.mxu0 0.0
  %276 = vmatpush1.msra.mxu0 0.0
  %277 = vmatprep.subr.mxu0 0.0
  %278 = vmatpush1.msra.mxu0 0.0
  %279 = vmatprep.subr.mxu0 0.0
  %280 = vmatpush1.msra.mxu0 0.0
  %281 = vmatprep.subr.mxu0 0.0
  %282 = vmatpush1.msra.mxu0 0.0
  %283 = vmatprep.subr.mxu0 0.0
  %284 = vmatpush1.msra.mxu0 0.0
  %285 = vmatprep.subr.mxu0 0.0
  %286 = vmatpush1.msra.mxu0 0.0
  %287 = vmatprep.subr.mxu0 0.0
  %288 = vmatpush1.msra.mxu0 0.0
  %289 = vmatprep.subr.mxu0 0.0
  %290 = vmatpush1.msra.mxu0 0.0
  %291 = vmatprep.mubr.f32.mxu0 0.0
  %292 = vmatmul.mubr.f32.gmra.mrb[0].mxu0 %v225
  %v293 = vpop.f32.mrb[0].mxu0
  %v294 = vadd.f32 0.0, %v293
  %v295 = vpop.f32.mrb[0].mxu0
  %296 = vdwg.mxu0
  %v297 = vadd.f32 %v222, %v294
  %v298 = vxor.u32 %v297, 2147483648
  %v299 = vmul.f32 %v298, 1.442695
  %v300 = vpow.pop %v299
  %v301 = vadd.f32 %v300, 1.0
  %v302 = vrcp.pop %v301
  %v303 = vmul.f32 1.0, %v302
  %v304 = vtanh.pop %v297
  %306 = vrot.lane.b32.xlu0 %v221, 32
  %v307 = vpop.permute.xlu0 %306
  %v309 = vmul.f32 %v303, %v307
  %311 = vrot.lane.b32.xlu0 %v304, 32
  %v312 = vpop.permute.xlu0 %311
  %v314 = vmul.f32 %v303, %v312
  %316 = vrot.lane.b32.xlu0 %v314, 32
  %v317 = vpop.permute.xlu0 %316
  %v319 = vadd.f32 %v309, %v317
  %v320 = vtanh.pop %v319
  %322 = vrot.lane.b32.xlu0 %v320, 32
  %v323 = vpop.permute.xlu0 %322
  %v325 = vmul.f32 %v303, %v323
  %327 = vrot.lane.b32.xlu0 %v325, 64
  %v328 = vpop.permute.xlu0 %327
  %330 = vst.msk [vmem:[#allocation3] sm:$0xff] %vm223, %v328
  %s331 = scalar_lea.vmem [#allocation2], 8
  %v332 = vld [vmem:[%s331] sm:$0xff]
  %v333 = vsel %vm223, %v328, 0
  %335 = vmatprep.subr.mxu0 0.0
  %336 = vmatpush1.msra.mxu0 %v216
  %337 = vmatprep.subr.mxu0 0.0
  %338 = vmatpush1.msra.mxu0 %v217
  %339 = vmatprep.subr.mxu0 0.0
  %340 = vmatpush1.msra.mxu0 %v218
  %341 = vmatprep.subr.mxu0 0.0
  %342 = vmatpush1.msra.mxu0 %v219
  %343 = vmatprep.subr.mxu0 0.0
  %344 = vmatpush1.msra.mxu0 0.0
  %345 = vmatprep.subr.mxu0 0.0
  %346 = vmatpush1.msra.mxu0 0.0
  %347 = vmatprep.subr.mxu0 0.0
  %348 = vmatpush1.msra.mxu0 0.0
  %349 = vmatprep.subr.mxu0 0.0
  %350 = vmatpush1.msra.mxu0 0.0
  %351 = vmatprep.subr.mxu0 0.0
  %352 = vmatpush1.msra.mxu0 0.0
  %353 = vmatprep.subr.mxu0 0.0
  %354 = vmatpush1.msra.mxu0 0.0
  %355 = vmatprep.subr.mxu0 0.0
  %356 = vmatpush1.msra.mxu0 0.0
  %357 = vmatprep.subr.mxu0 0.0
  %358 = vmatpush1.msra.mxu0 0.0
  %359 = vmatprep.subr.mxu0 0.0
  %360 = vmatpush1.msra.mxu0 0.0
  %361 = vmatprep.subr.mxu0 0.0
  %362 = vmatpush1.msra.mxu0 0.0
  %363 = vmatprep.subr.mxu0 0.0
  %364 = vmatpush1.msra.mxu0 0.0
  %365 = vmatprep.subr.mxu0 0.0
  %366 = vmatpush1.msra.mxu0 0.0
  %367 = vmatprep.subr.mxu0 0.0
  %368 = vmatpush1.msra.mxu0 0.0
  %369 = vmatprep.subr.mxu0 0.0
  %370 = vmatpush1.msra.mxu0 0.0
  %371 = vmatprep.subr.mxu0 0.0
  %372 = vmatpush1.msra.mxu0 0.0
  %373 = vmatprep.subr.mxu0 0.0
  %374 = vmatpush1.msra.mxu0 0.0
  %375 = vmatprep.subr.mxu0 0.0
  %376 = vmatpush1.msra.mxu0 0.0
  %377 = vmatprep.subr.mxu0 0.0
  %378 = vmatpush1.msra.mxu0 0.0
  %379 = vmatprep.subr.mxu0 0.0
  %380 = vmatpush1.msra.mxu0 0.0
  %381 = vmatprep.subr.mxu0 0.0
  %382 = vmatpush1.msra.mxu0 0.0
  %383 = vmatprep.subr.mxu0 0.0
  %384 = vmatpush1.msra.mxu0 0.0
  %385 = vmatprep.subr.mxu0 0.0
  %386 = vmatpush1.msra.mxu0 0.0
  %387 = vmatprep.subr.mxu0 0.0
  %388 = vmatpush1.msra.mxu0 0.0
  %389 = vmatprep.subr.mxu0 0.0
  %390 = vmatpush1.msra.mxu0 0.0
  %391 = vmatprep.subr.mxu0 0.0
  %392 = vmatpush1.msra.mxu0 0.0
  %393 = vmatprep.subr.mxu0 0.0
  %394 = vmatpush1.msra.mxu0 0.0
  %395 = vmatprep.subr.mxu0 0.0
  %396 = vmatpush1.msra.mxu0 0.0
  %397 = vmatprep.subr.mxu0 0.0
  %398 = vmatpush1.msra.mxu0 0.0
  %399 = vmatprep.mubr.f32.mxu0 0.0
  %400 = vmatmul.mubr.f32.gmra.mrb[0].mxu0 %v333
  %v401 = vpop.f32.mrb[0].mxu0
  %v402 = vadd.f32 0.0, %v401
  %v403 = vpop.f32.mrb[0].mxu0
  %404 = vdwg.mxu0
  %v405 = vadd.f32 %v332, %v402
  %v406 = vxor.u32 %v405, 2147483648
  %v407 = vmul.f32 %v406, 1.442695
  %v408 = vpow.pop %v407
  %v409 = vadd.f32 %v408, 1.0
  %v410 = vrcp.pop %v409
  %v411 = vmul.f32 1.0, %v410
  %v412 = vtanh.pop %v405
  %v413 = vmul.f32 %v411, %v319
  %415 = vrot.lane.b32.xlu0 %v412, 32
  %v416 = vpop.permute.xlu0 %415
  %v418 = vmul.f32 %v411, %v416
  %420 = vrot.lane.b32.xlu0 %v418, 32
  %v421 = vpop.permute.xlu0 %420
  %v423 = vadd.f32 %v413, %v421
  %v424 = vtanh.pop %v423
  %426 = vrot.lane.b32.xlu0 %v424, 32
  %v427 = vpop.permute.xlu0 %426
  %v429 = vmul.f32 %v411, %v427
  %431 = vrot.lane.b32.xlu0 %v429, 64
  %v432 = vpop.permute.xlu0 %431
  %s434 = scalar_lea.vmem [#allocation3], 8
  %435 = vst.msk [vmem:[%s434] sm:$0xff] %vm223, %v432
  %s436 = scalar_lea.vmem [#allocation2], 16
  %v437 = vld [vmem:[%s436] sm:$0xff]
  %v438 = vsel %vm223, %v432, 0
  %440 = vmatprep.subr.mxu0 0.0
  %441 = vmatpush1.msra.mxu0 %v216
  %442 = vmatprep.subr.mxu0 0.0
  %443 = vmatpush1.msra.mxu0 %v217
  %444 = vmatprep.subr.mxu0 0.0
  %445 = vmatpush1.msra.mxu0 %v218
  %446 = vmatprep.subr.mxu0 0.0
  %447 = vmatpush1.msra.mxu0 %v219
  %448 = vmatprep.subr.mxu0 0.0
  %449 = vmatpush1.msra.mxu0 0.0
  %450 = vmatprep.subr.mxu0 0.0
  %451 = vmatpush1.msra.mxu0 0.0
  %452 = vmatprep.subr.mxu0 0.0
  %453 = vmatpush1.msra.mxu0 0.0
  %454 = vmatprep.subr.mxu0 0.0
  %455 = vmatpush1.msra.mxu0 0.0
  %456 = vmatprep.subr.mxu0 0.0
  %457 = vmatpush1.msra.mxu0 0.0
  %458 = vmatprep.subr.mxu0 0.0
  %459 = vmatpush1.msra.mxu0 0.0
  %460 = vmatprep.subr.mxu0 0.0
  %461 = vmatpush1.msra.mxu0 0.0
  %462 = vmatprep.subr.mxu0 0.0
  %463 = vmatpush1.msra.mxu0 0.0
  %464 = vmatprep.subr.mxu0 0.0
  %465 = vmatpush1.msra.mxu0 0.0
  %466 = vmatprep.subr.mxu0 0.0
  %467 = vmatpush1.msra.mxu0 0.0
  %468 = vmatprep.subr.mxu0 0.0
  %469 = vmatpush1.msra.mxu0 0.0
  %470 = vmatprep.subr.mxu0 0.0
  %471 = vmatpush1.msra.mxu0 0.0
  %472 = vmatprep.subr.mxu0 0.0
  %473 = vmatpush1.msra.mxu0 0.0
  %474 = vmatprep.subr.mxu0 0.0
  %475 = vmatpush1.msra.mxu0 0.0
  %476 = vmatprep.subr.mxu0 0.0
  %477 = vmatpush1.msra.mxu0 0.0
  %478 = vmatprep.subr.mxu0 0.0
  %479 = vmatpush1.msra.mxu0 0.0
  %480 = vmatprep.subr.mxu0 0.0
  %481 = vmatpush1.msra.mxu0 0.0
  %482 = vmatprep.subr.mxu0 0.0
  %483 = vmatpush1.msra.mxu0 0.0
  %484 = vmatprep.subr.mxu0 0.0
  %485 = vmatpush1.msra.mxu0 0.0
  %486 = vmatprep.subr.mxu0 0.0
  %487 = vmatpush1.msra.mxu0 0.0
  %488 = vmatprep.subr.mxu0 0.0
  %489 = vmatpush1.msra.mxu0 0.0
  %490 = vmatprep.subr.mxu0 0.0
  %491 = vmatpush1.msra.mxu0 0.0
  %492 = vmatprep.subr.mxu0 0.0
  %493 = vmatpush1.msra.mxu0 0.0
  %494 = vmatprep.subr.mxu0 0.0
  %495 = vmatpush1.msra.mxu0 0.0
  %496 = vmatprep.subr.mxu0 0.0
  %497 = vmatpush1.msra.mxu0 0.0
  %498 = vmatprep.subr.mxu0 0.0
  %499 = vmatpush1.msra.mxu0 0.0
  %500 = vmatprep.subr.mxu0 0.0
  %501 = vmatpush1.msra.mxu0 0.0
  %502 = vmatprep.subr.mxu0 0.0
  %503 = vmatpush1.msra.mxu0 0.0
  %504 = vmatprep.mubr.f32.mxu0 0.0
  %505 = vmatmul.mubr.f32.gmra.mrb[0].mxu0 %v438
  %v506 = vpop.f32.mrb[0].mxu0
  %v507 = vadd.f32 0.0, %v506
  %v508 = vpop.f32.mrb[0].mxu0
  %509 = vdwg.mxu0
  %v510 = vadd.f32 %v437, %v507
  %v511 = vxor.u32 %v510, 2147483648
  %v512 = vmul.f32 %v511, 1.442695
  %v513 = vpow.pop %v512
  %v514 = vadd.f32 %v513, 1.0
  %v515 = vrcp.pop %v514
  %v516 = vmul.f32 1.0, %v515
  %v517 = vtanh.pop %v510
  %v518 = vmul.f32 %v516, %v423
  %520 = vrot.lane.b32.xlu0 %v517, 32
  %v521 = vpop.permute.xlu0 %520
  %v523 = vmul.f32 %v516, %v521
  %525 = vrot.lane.b32.xlu0 %v523, 32
  %v526 = vpop.permute.xlu0 %525
  %v528 = vadd.f32 %v518, %v526
  %v529 = vtanh.pop %v528
  %531 = vrot.lane.b32.xlu0 %v529, 32
  %v532 = vpop.permute.xlu0 %531
  %v534 = vmul.f32 %v516, %v532
  %536 = vrot.lane.b32.xlu0 %v534, 64
  %v537 = vpop.permute.xlu0 %536
  %s539 = scalar_lea.vmem [#allocation3], 16
  %540 = vst.msk [vmem:[%s539] sm:$0xff] %vm223, %v537
  %s541 = scalar_lea.vmem [#allocation2], 24
  %v542 = vld [vmem:[%s541] sm:$0xff]
  %v543 = vsel %vm223, %v537, 0
  %545 = vmatprep.subr.mxu0 0.0
  %546 = vmatpush1.msra.mxu0 %v216
  %547 = vmatprep.subr.mxu0 0.0
  %548 = vmatpush1.msra.mxu0 %v217
  %549 = vmatprep.subr.mxu0 0.0
  %550 = vmatpush1.msra.mxu0 %v218
  %551 = vmatprep.subr.mxu0 0.0
  %552 = vmatpush1.msra.mxu0 %v219
  %553 = vmatprep.subr.mxu0 0.0
  %554 = vmatpush1.msra.mxu0 0.0
  %555 = vmatprep.subr.mxu0 0.0
  %556 = vmatpush1.msra.mxu0 0.0
  %557 = vmatprep.subr.mxu0 0.0
  %558 = vmatpush1.msra.mxu0 0.0
  %559 = vmatprep.subr.mxu0 0.0
  %560 = vmatpush1.msra.mxu0 0.0
  %561 = vmatprep.subr.mxu0 0.0
  %562 = vmatpush1.msra.mxu0 0.0
  %563 = vmatprep.subr.mxu0 0.0
  %564 = vmatpush1.msra.mxu0 0.0
  %565 = vmatprep.subr.mxu0 0.0
  %566 = vmatpush1.msra.mxu0 0.0
  %567 = vmatprep.subr.mxu0 0.0
  %568 = vmatpush1.msra.mxu0 0.0
  %569 = vmatprep.subr.mxu0 0.0
  %570 = vmatpush1.msra.mxu0 0.0
  %571 = vmatprep.subr.mxu0 0.0
  %572 = vmatpush1.msra.mxu0 0.0
  %573 = vmatprep.subr.mxu0 0.0
  %574 = vmatpush1.msra.mxu0 0.0
  %575 = vmatprep.subr.mxu0 0.0
  %576 = vmatpush1.msra.mxu0 0.0
  %577 = vmatprep.subr.mxu0 0.0
  %578 = vmatpush1.msra.mxu0 0.0
  %579 = vmatprep.subr.mxu0 0.0
  %580 = vmatpush1.msra.mxu0 0.0
  %581 = vmatprep.subr.mxu0 0.0
  %582 = vmatpush1.msra.mxu0 0.0
  %583 = vmatprep.subr.mxu0 0.0
  %584 = vmatpush1.msra.mxu0 0.0
  %585 = vmatprep.subr.mxu0 0.0
  %586 = vmatpush1.msra.mxu0 0.0
  %587 = vmatprep.subr.mxu0 0.0
  %588 = vmatpush1.msra.mxu0 0.0
  %589 = vmatprep.subr.mxu0 0.0
  %590 = vmatpush1.msra.mxu0 0.0
  %591 = vmatprep.subr.mxu0 0.0
  %592 = vmatpush1.msra.mxu0 0.0
  %593 = vmatprep.subr.mxu0 0.0
  %594 = vmatpush1.msra.mxu0 0.0
  %595 = vmatprep.subr.mxu0 0.0
  %596 = vmatpush1.msra.mxu0 0.0
  %597 = vmatprep.subr.mxu0 0.0
  %598 = vmatpush1.msra.mxu0 0.0
  %599 = vmatprep.subr.mxu0 0.0
  %600 = vmatpush1.msra.mxu0 0.0
  %601 = vmatprep.subr.mxu0 0.0
  %602 = vmatpush1.msra.mxu0 0.0
  %603 = vmatprep.subr.mxu0 0.0
  %604 = vmatpush1.msra.mxu0 0.0
  %605 = vmatprep.subr.mxu0 0.0
  %606 = vmatpush1.msra.mxu0 0.0
  %607 = vmatprep.subr.mxu0 0.0
  %608 = vmatpush1.msra.mxu0 0.0
  %609 = vmatprep.mubr.f32.mxu0 0.0
  %610 = vmatmul.mubr.f32.gmra.mrb[0].mxu0 %v543
  %v611 = vpop.f32.mrb[0].mxu0
  %v612 = vadd.f32 0.0, %v611
  %v613 = vpop.f32.mrb[0].mxu0
  %614 = vdwg.mxu0
  %v615 = vadd.f32 %v542, %v612
  %v616 = vxor.u32 %v615, 2147483648
  %v617 = vmul.f32 %v616, 1.442695
  %v618 = vpow.pop %v617
  %v619 = vadd.f32 %v618, 1.0
  %v620 = vrcp.pop %v619
  %v621 = vmul.f32 1.0, %v620
  %v622 = vtanh.pop %v615
  %v623 = vmul.f32 %v621, %v528
  %625 = vrot.lane.b32.xlu0 %v622, 32
  %v626 = vpop.permute.xlu0 %625
  %v628 = vmul.f32 %v621, %v626
  %630 = vrot.lane.b32.xlu0 %v628, 32
  %v631 = vpop.permute.xlu0 %630
  %v633 = vadd.f32 %v623, %v631
  %v634 = vtanh.pop %v633
  %636 = vrot.lane.b32.xlu0 %v634, 32
  %v637 = vpop.permute.xlu0 %636
  %v639 = vmul.f32 %v621, %v637
  %641 = vrot.lane.b32.xlu0 %v639, 64
  %v642 = vpop.permute.xlu0 %641
  %s644 = scalar_lea.vmem [#allocation3], 24
  %645 = vst.msk [vmem:[%s644] sm:$0xff] %vm223, %v642
  %s646 = scalar_lea.vmem [#allocation2], 32
  %v647 = vld [vmem:[%s646] sm:$0xff]
  %v648 = vsel %vm223, %v642, 0
  %650 = vmatprep.subr.mxu0 0.0
  %651 = vmatpush1.msra.mxu0 %v216
  %652 = vmatprep.subr.mxu0 0.0
  %653 = vmatpush1.msra.mxu0 %v217
  %654 = vmatprep.subr.mxu0 0.0
  %655 = vmatpush1.msra.mxu0 %v218
  %656 = vmatprep.subr.mxu0 0.0
  %657 = vmatpush1.msra.mxu0 %v219
  %658 = vmatprep.subr.mxu0 0.0
  %659 = vmatpush1.msra.mxu0 0.0
  %660 = vmatprep.subr.mxu0 0.0
  %661 = vmatpush1.msra.mxu0 0.0
  %662 = vmatprep.subr.mxu0 0.0
  %663 = vmatpush1.msra.mxu0 0.0
  %664 = vmatprep.subr.mxu0 0.0
  %665 = vmatpush1.msra.mxu0 0.0
  %666 = vmatprep.subr.mxu0 0.0
  %667 = vmatpush1.msra.mxu0 0.0
  %668 = vmatprep.subr.mxu0 0.0
  %669 = vmatpush1.msra.mxu0 0.0
  %670 = vmatprep.subr.mxu0 0.0
  %671 = vmatpush1.msra.mxu0 0.0
  %672 = vmatprep.subr.mxu0 0.0
  %673 = vmatpush1.msra.mxu0 0.0
  %674 = vmatprep.subr.mxu0 0.0
  %675 = vmatpush1.msra.mxu0 0.0
  %676 = vmatprep.subr.mxu0 0.0
  %677 = vmatpush1.msra.mxu0 0.0
  %678 = vmatprep.subr.mxu0 0.0
  %679 = vmatpush1.msra.mxu0 0.0
  %680 = vmatprep.subr.mxu0 0.0
  %681 = vmatpush1.msra.mxu0 0.0
  %682 = vmatprep.subr.mxu0 0.0
  %683 = vmatpush1.msra.mxu0 0.0
  %684 = vmatprep.subr.mxu0 0.0
  %685 = vmatpush1.msra.mxu0 0.0
  %686 = vmatprep.subr.mxu0 0.0
  %687 = vmatpush1.msra.mxu0 0.0
  %688 = vmatprep.subr.mxu0 0.0
  %689 = vmatpush1.msra.mxu0 0.0
  %690 = vmatprep.subr.mxu0 0.0
  %691 = vmatpush1.msra.mxu0 0.0
  %692 = vmatprep.subr.mxu0 0.0
  %693 = vmatpush1.msra.mxu0 0.0
  %694 = vmatprep.subr.mxu0 0.0
  %695 = vmatpush1.msra.mxu0 0.0
  %696 = vmatprep.subr.mxu0 0.0
  %697 = vmatpush1.msra.mxu0 0.0
  %698 = vmatprep.subr.mxu0 0.0
  %699 = vmatpush1.msra.mxu0 0.0
  %700 = vmatprep.subr.mxu0 0.0
  %701 = vmatpush1.msra.mxu0 0.0
  %702 = vmatprep.subr.mxu0 0.0
  %703 = vmatpush1.msra.mxu0 0.0
  %704 = vmatprep.subr.mxu0 0.0
  %705 = vmatpush1.msra.mxu0 0.0
  %706 = vmatprep.subr.mxu0 0.0
  %707 = vmatpush1.msra.mxu0 0.0
  %708 = vmatprep.subr.mxu0 0.0
  %709 = vmatpush1.msra.mxu0 0.0
  %710 = vmatprep.subr.mxu0 0.0
  %711 = vmatpush1.msra.mxu0 0.0
  %712 = vmatprep.subr.mxu0 0.0
  %713 = vmatpush1.msra.mxu0 0.0
  %714 = vmatprep.mubr.f32.mxu0 0.0
  %715 = vmatmul.mubr.f32.gmra.mrb[0].mxu0 %v648
  %v716 = vpop.f32.mrb[0].mxu0
  %v717 = vadd.f32 0.0, %v716
  %v718 = vpop.f32.mrb[0].mxu0
  %719 = vdwg.mxu0
  %v720 = vadd.f32 %v647, %v717
  %v721 = vxor.u32 %v720, 2147483648
  %v722 = vmul.f32 %v721, 1.442695
  %v723 = vpow.pop %v722
  %v724 = vadd.f32 %v723, 1.0
  %v725 = vrcp.pop %v724
  %v726 = vmul.f32 1.0, %v725
  %v727 = vtanh.pop %v720
  %v728 = vmul.f32 %v726, %v633
  %730 = vrot.lane.b32.xlu0 %v727, 32
  %v731 = vpop.permute.xlu0 %730
  %v733 = vmul.f32 %v726, %v731
  %735 = vrot.lane.b32.xlu0 %v733, 32
  %v736 = vpop.permute.xlu0 %735
  %v738 = vadd.f32 %v728, %v736
  %v739 = vtanh.pop %v738
  %741 = vrot.lane.b32.xlu0 %v739, 32
  %v742 = vpop.permute.xlu0 %741
  %v744 = vmul.f32 %v726, %v742
  %746 = vrot.lane.b32.xlu0 %v744, 64
  %v747 = vpop.permute.xlu0 %746
  %s749 = scalar_lea.vmem [#allocation3], 32
  %750 = vst.msk [vmem:[%s749] sm:$0xff] %vm223, %v747
  %s751 = scalar_lea.vmem [#allocation2], 40
  %v752 = vld [vmem:[%s751] sm:$0xff]
  %v753 = vsel %vm223, %v747, 0
  %755 = vmatprep.subr.mxu0 0.0
  %756 = vmatpush1.msra.mxu0 %v216
  %757 = vmatprep.subr.mxu0 0.0
  %758 = vmatpush1.msra.mxu0 %v217
  %759 = vmatprep.subr.mxu0 0.0
  %760 = vmatpush1.msra.mxu0 %v218
  %761 = vmatprep.subr.mxu0 0.0
  %762 = vmatpush1.msra.mxu0 %v219
  %763 = vmatprep.subr.mxu0 0.0
  %764 = vmatpush1.msra.mxu0 0.0
  %765 = vmatprep.subr.mxu0 0.0
  %766 = vmatpush1.msra.mxu0 0.0
  %767 = vmatprep.subr.mxu0 0.0
  %768 = vmatpush1.msra.mxu0 0.0
  %769 = vmatprep.subr.mxu0 0.0
  %770 = vmatpush1.msra.mxu0 0.0
  %771 = vmatprep.subr.mxu0 0.0
  %772 = vmatpush1.msra.mxu0 0.0
  %773 = vmatprep.subr.mxu0 0.0
  %774 = vmatpush1.msra.mxu0 0.0
  %775 = vmatprep.subr.mxu0 0.0
  %776 = vmatpush1.msra.mxu0 0.0
  %777 = vmatprep.subr.mxu0 0.0
  %778 = vmatpush1.msra.mxu0 0.0
  %779 = vmatprep.subr.mxu0 0.0
  %780 = vmatpush1.msra.mxu0 0.0
  %781 = vmatprep.subr.mxu0 0.0
  %782 = vmatpush1.msra.mxu0 0.0
  %783 = vmatprep.subr.mxu0 0.0
  %784 = vmatpush1.msra.mxu0 0.0
  %785 = vmatprep.subr.mxu0 0.0
  %786 = vmatpush1.msra.mxu0 0.0
  %787 = vmatprep.subr.mxu0 0.0
  %788 = vmatpush1.msra.mxu0 0.0
  %789 = vmatprep.subr.mxu0 0.0
  %790 = vmatpush1.msra.mxu0 0.0
  %791 = vmatprep.subr.mxu0 0.0
  %792 = vmatpush1.msra.mxu0 0.0
  %793 = vmatprep.subr.mxu0 0.0
  %794 = vmatpush1.msra.mxu0 0.0
  %795 = vmatprep.subr.mxu0 0.0
  %796 = vmatpush1.msra.mxu0 0.0
  %797 = vmatprep.subr.mxu0 0.0
  %798 = vmatpush1.msra.mxu0 0.0
  %799 = vmatprep.subr.mxu0 0.0
  %800 = vmatpush1.msra.mxu0 0.0
  %801 = vmatprep.subr.mxu0 0.0
  %802 = vmatpush1.msra.mxu0 0.0
  %803 = vmatprep.subr.mxu0 0.0
  %804 = vmatpush1.msra.mxu0 0.0
  %805 = vmatprep.subr.mxu0 0.0
  %806 = vmatpush1.msra.mxu0 0.0
  %807 = vmatprep.subr.mxu0 0.0
  %808 = vmatpush1.msra.mxu0 0.0
  %809 = vmatprep.subr.mxu0 0.0
  %810 = vmatpush1.msra.mxu0 0.0
  %811 = vmatprep.subr.mxu0 0.0
  %812 = vmatpush1.msra.mxu0 0.0
  %813 = vmatprep.subr.mxu0 0.0
  %814 = vmatpush1.msra.mxu0 0.0
  %815 = vmatprep.subr.mxu0 0.0
  %816 = vmatpush1.msra.mxu0 0.0
  %817 = vmatprep.subr.mxu0 0.0
  %818 = vmatpush1.msra.mxu0 0.0
  %819 = vmatprep.mubr.f32.mxu0 0.0
  %820 = vmatmul.mubr.f32.gmra.mrb[0].mxu0 %v753
  %v821 = vpop.f32.mrb[0].mxu0
  %v822 = vadd.f32 0.0, %v821
  %v823 = vpop.f32.mrb[0].mxu0
  %824 = vdwg.mxu0
  %v825 = vadd.f32 %v752, %v822
  %v826 = vxor.u32 %v825, 2147483648
  %v827 = vmul.f32 %v826, 1.442695
  %v828 = vpow.pop %v827
  %v829 = vadd.f32 %v828, 1.0
  %v830 = vrcp.pop %v829
  %v831 = vmul.f32 1.0, %v830
  %v832 = vtanh.pop %v825
  %v833 = vmul.f32 %v831, %v738
  %835 = vrot.lane.b32.xlu0 %v832, 32
  %v836 = vpop.permute.xlu0 %835
  %v838 = vmul.f32 %v831, %v836
  %840 = vrot.lane.b32.xlu0 %v838, 32
  %v841 = vpop.permute.xlu0 %840
  %v843 = vadd.f32 %v833, %v841
  %v844 = vtanh.pop %v843
  %846 = vrot.lane.b32.xlu0 %v844, 32
  %v847 = vpop.permute.xlu0 %846
  %v849 = vmul.f32 %v831, %v847
  %851 = vrot.lane.b32.xlu0 %v849, 64
  %v852 = vpop.permute.xlu0 %851
  %s854 = scalar_lea.vmem [#allocation3], 40
  %855 = vst.msk [vmem:[%s854] sm:$0xff] %vm223, %v852
  %s856 = scalar_lea.vmem [#allocation2], 48
  %v857 = vld [vmem:[%s856] sm:$0xff]
  %v858 = vsel %vm223, %v852, 0
  %860 = vmatprep.subr.mxu0 0.0
  %861 = vmatpush1.msra.mxu0 %v216
  %862 = vmatprep.subr.mxu0 0.0
  %863 = vmatpush1.msra.mxu0 %v217
  %864 = vmatprep.subr.mxu0 0.0
  %865 = vmatpush1.msra.mxu0 %v218
  %866 = vmatprep.subr.mxu0 0.0
  %867 = vmatpush1.msra.mxu0 %v219
  %868 = vmatprep.subr.mxu0 0.0
  %869 = vmatpush1.msra.mxu0 0.0
  %870 = vmatprep.subr.mxu0 0.0
  %871 = vmatpush1.msra.mxu0 0.0
  %872 = vmatprep.subr.mxu0 0.0
  %873 = vmatpush1.msra.mxu0 0.0
  %874 = vmatprep.subr.mxu0 0.0
  %875 = vmatpush1.msra.mxu0 0.0
  %876 = vmatprep.subr.mxu0 0.0
  %877 = vmatpush1.msra.mxu0 0.0
  %878 = vmatprep.subr.mxu0 0.0
  %879 = vmatpush1.msra.mxu0 0.0
  %880 = vmatprep.subr.mxu0 0.0
  %881 = vmatpush1.msra.mxu0 0.0
  %882 = vmatprep.subr.mxu0 0.0
  %883 = vmatpush1.msra.mxu0 0.0
  %884 = vmatprep.subr.mxu0 0.0
  %885 = vmatpush1.msra.mxu0 0.0
  %886 = vmatprep.subr.mxu0 0.0
  %887 = vmatpush1.msra.mxu0 0.0
  %888 = vmatprep.subr.mxu0 0.0
  %889 = vmatpush1.msra.mxu0 0.0
  %890 = vmatprep.subr.mxu0 0.0
  %891 = vmatpush1.msra.mxu0 0.0
  %892 = vmatprep.subr.mxu0 0.0
  %893 = vmatpush1.msra.mxu0 0.0
  %894 = vmatprep.subr.mxu0 0.0
  %895 = vmatpush1.msra.mxu0 0.0
  %896 = vmatprep.subr.mxu0 0.0
  %897 = vmatpush1.msra.mxu0 0.0
  %898 = vmatprep.subr.mxu0 0.0
  %899 = vmatpush1.msra.mxu0 0.0
  %900 = vmatprep.subr.mxu0 0.0
  %901 = vmatpush1.msra.mxu0 0.0
  %902 = vmatprep.subr.mxu0 0.0
  %903 = vmatpush1.msra.mxu0 0.0
  %904 = vmatprep.subr.mxu0 0.0
  %905 = vmatpush1.msra.mxu0 0.0
  %906 = vmatprep.subr.mxu0 0.0
  %907 = vmatpush1.msra.mxu0 0.0
  %908 = vmatprep.subr.mxu0 0.0
  %909 = vmatpush1.msra.mxu0 0.0
  %910 = vmatprep.subr.mxu0 0.0
  %911 = vmatpush1.msra.mxu0 0.0
  %912 = vmatprep.subr.mxu0 0.0
  %913 = vmatpush1.msra.mxu0 0.0
  %914 = vmatprep.subr.mxu0 0.0
  %915 = vmatpush1.msra.mxu0 0.0
  %916 = vmatprep.subr.mxu0 0.0
  %917 = vmatpush1.msra.mxu0 0.0
  %918 = vmatprep.subr.mxu0 0.0
  %919 = vmatpush1.msra.mxu0 0.0
  %920 = vmatprep.subr.mxu0 0.0
  %921 = vmatpush1.msra.mxu0 0.0
  %922 = vmatprep.subr.mxu0 0.0
  %923 = vmatpush1.msra.mxu0 0.0
  %924 = vmatprep.mubr.f32.mxu0 0.0
  %925 = vmatmul.mubr.f32.gmra.mrb[0].mxu0 %v858
  %v926 = vpop.f32.mrb[0].mxu0
  %v927 = vadd.f32 0.0, %v926
  %v928 = vpop.f32.mrb[0].mxu0
  %929 = vdwg.mxu0
  %v930 = vadd.f32 %v857, %v927
  %v931 = vxor.u32 %v930, 2147483648
  %v932 = vmul.f32 %v931, 1.442695
  %v933 = vpow.pop %v932
  %v934 = vadd.f32 %v933, 1.0
  %v935 = vrcp.pop %v934
  %v936 = vmul.f32 1.0, %v935
  %v937 = vtanh.pop %v930
  %v938 = vmul.f32 %v936, %v843
  %940 = vrot.lane.b32.xlu0 %v937, 32
  %v941 = vpop.permute.xlu0 %940
  %v943 = vmul.f32 %v936, %v941
  %945 = vrot.lane.b32.xlu0 %v943, 32
  %v946 = vpop.permute.xlu0 %945
  %v948 = vadd.f32 %v938, %v946
  %v949 = vtanh.pop %v948
  %951 = vrot.lane.b32.xlu0 %v949, 32
  %v952 = vpop.permute.xlu0 %951
  %v954 = vmul.f32 %v936, %v952
  %956 = vrot.lane.b32.xlu0 %v954, 64
  %v957 = vpop.permute.xlu0 %956
  %s959 = scalar_lea.vmem [#allocation3], 48
  %960 = vst.msk [vmem:[%s959] sm:$0xff] %vm223, %v957
  %s961 = scalar_lea.vmem [#allocation2], 56
  %v962 = vld [vmem:[%s961] sm:$0xff]
  %v963 = vsel %vm223, %v957, 0
  %965 = vmatprep.subr.mxu0 0.0
  %966 = vmatpush1.msra.mxu0 %v216
  %967 = vmatprep.subr.mxu0 0.0
  %968 = vmatpush1.msra.mxu0 %v217
  %969 = vmatprep.subr.mxu0 0.0
  %970 = vmatpush1.msra.mxu0 %v218
  %971 = vmatprep.subr.mxu0 0.0
  %972 = vmatpush1.msra.mxu0 %v219
  %973 = vmatprep.subr.mxu0 0.0
  %974 = vmatpush1.msra.mxu0 0.0
  %975 = vmatprep.subr.mxu0 0.0
  %976 = vmatpush1.msra.mxu0 0.0
  %977 = vmatprep.subr.mxu0 0.0
  %978 = vmatpush1.msra.mxu0 0.0
  %979 = vmatprep.subr.mxu0 0.0
  %980 = vmatpush1.msra.mxu0 0.0
  %981 = vmatprep.subr.mxu0 0.0
  %982 = vmatpush1.msra.mxu0 0.0
  %983 = vmatprep.subr.mxu0 0.0
  %984 = vmatpush1.msra.mxu0 0.0
  %985 = vmatprep.subr.mxu0 0.0
  %986 = vmatpush1.msra.mxu0 0.0
  %987 = vmatprep.subr.mxu0 0.0
  %988 = vmatpush1.msra.mxu0 0.0
  %989 = vmatprep.subr.mxu0 0.0
  %990 = vmatpush1.msra.mxu0 0.0
  %991 = vmatprep.subr.mxu0 0.0
  %992 = vmatpush1.msra.mxu0 0.0
  %993 = vmatprep.subr.mxu0 0.0
  %994 = vmatpush1.msra.mxu0 0.0
  %995 = vmatprep.subr.mxu0 0.0
  %996 = vmatpush1.msra.mxu0 0.0
  %997 = vmatprep.subr.mxu0 0.0
  %998 = vmatpush1.msra.mxu0 0.0
  %999 = vmatprep.subr.mxu0 0.0
  %1000 = vmatpush1.msra.mxu0 0.0
  %1001 = vmatprep.subr.mxu0 0.0
  %1002 = vmatpush1.msra.mxu0 0.0
  %1003 = vmatprep.subr.mxu0 0.0
  %1004 = vmatpush1.msra.mxu0 0.0
  %1005 = vmatprep.subr.mxu0 0.0
  %1006 = vmatpush1.msra.mxu0 0.0
  %1007 = vmatprep.subr.mxu0 0.0
  %1008 = vmatpush1.msra.mxu0 0.0
  %1009 = vmatprep.subr.mxu0 0.0
  %1010 = vmatpush1.msra.mxu0 0.0
  %1011 = vmatprep.subr.mxu0 0.0
  %1012 = vmatpush1.msra.mxu0 0.0
  %1013 = vmatprep.subr.mxu0 0.0
  %1014 = vmatpush1.msra.mxu0 0.0
  %1015 = vmatprep.subr.mxu0 0.0
  %1016 = vmatpush1.msra.mxu0 0.0
  %1017 = vmatprep.subr.mxu0 0.0
  %1018 = vmatpush1.msra.mxu0 0.0
  %1019 = vmatprep.subr.mxu0 0.0
  %1020 = vmatpush1.msra.mxu0 0.0
  %1021 = vmatprep.subr.mxu0 0.0
  %1022 = vmatpush1.msra.mxu0 0.0
  %1023 = vmatprep.subr.mxu0 0.0
  %1024 = vmatpush1.msra.mxu0 0.0
  %1025 = vmatprep.subr.mxu0 0.0
  %1026 = vmatpush1.msra.mxu0 0.0
  %1027 = vmatprep.subr.mxu0 0.0
  %1028 = vmatpush1.msra.mxu0 0.0
  %1029 = vmatprep.mubr.f32.mxu0 0.0
  %1030 = vmatmul.mubr.f32.gmra.mrb[0].mxu0 %v963
  %v1031 = vpop.f32.mrb[0].mxu0
  %v1032 = vadd.f32 0.0, %v1031
  %v1033 = vpop.f32.mrb[0].mxu0
  %1034 = vdwg.mxu0
  %v1035 = vadd.f32 %v962, %v1032
  %v1036 = vxor.u32 %v1035, 2147483648
  %v1037 = vmul.f32 %v1036, 1.442695
  %v1038 = vpow.pop %v1037
  %v1039 = vadd.f32 %v1038, 1.0
  %v1040 = vrcp.pop %v1039
  %v1041 = vmul.f32 1.0, %v1040
  %v1042 = vtanh.pop %v1035
  %v1043 = vmul.f32 %v1041, %v948
  %1045 = vrot.lane.b32.xlu0 %v1042, 32
  %v1046 = vpop.permute.xlu0 %1045
  %v1048 = vmul.f32 %v1041, %v1046
  %1050 = vrot.lane.b32.xlu0 %v1048, 32
  %v1051 = vpop.permute.xlu0 %1050
  %v1053 = vadd.f32 %v1043, %v1051
  %v1054 = vtanh.pop %v1053
  %1056 = vrot.lane.b32.xlu0 %v1054, 32
  %v1057 = vpop.permute.xlu0 %1056
  %v1059 = vmul.f32 %v1041, %v1057
  %1061 = vrot.lane.b32.xlu0 %v1059, 64
  %v1062 = vpop.permute.xlu0 %1061
  %s1064 = scalar_lea.vmem [#allocation3], 56
  %1065 = vst.msk [vmem:[%s1064] sm:$0xff] %vm223, %v1062
  %1066 = vst.msk [vmem:[%s8] sm:$0xff] %vm223, %v1062
  %1068 = vrot.lane.b32.xlu0 %v1053, 96
  %v1069 = vpop.permute.xlu0 %1068
  %1071 = vst.msk [vmem:[%s9] sm:$0xff] %vm223, %v1069
  %v1072 = vld [vmem:[#allocation3] sm:$0xff]
  %v1073 = vld [vmem:[#allocation3 + $0x8] sm:$0xff]
  %v1074 = vld [vmem:[#allocation3 + $0x10] sm:$0xff]
  %v1075 = vld [vmem:[#allocation3 + $0x18] sm:$0xff]
  %v1076 = vld [vmem:[#allocation3 + $0x20] sm:$0xff]
  %v1077 = vld [vmem:[#allocation3 + $0x28] sm:$0xff]
  %v1078 = vld [vmem:[#allocation3 + $0x30] sm:$0xff]
  %v1079 = vld [vmem:[#allocation3 + $0x38] sm:$0xff]
  %v1080 = vld [vmem:[%s3] sm:$0xff]
  %v1081 = vld [vmem:[%s3 + $0x8] sm:$0xff]
  %v1082 = vld [vmem:[%s3 + $0x10] sm:$0xff]
  %v1083 = vld [vmem:[%s3 + $0x18] sm:$0xff]
  %v1084 = vld [vmem:[%s3 + $0x20] sm:$0xff]
  %v1085 = vld [vmem:[%s3 + $0x28] sm:$0xff]
  %v1086 = vld [vmem:[%s3 + $0x30] sm:$0xff]
  %v1087 = vld [vmem:[%s3 + $0x38] sm:$0xff]
  %v1088 = vld [vmem:[%s3 + $0x40] sm:$0xff]
  %v1089 = vld [vmem:[%s3 + $0x48] sm:$0xff]
  %v1090 = vld [vmem:[%s3 + $0x50] sm:$0xff]
  %v1091 = vld [vmem:[%s3 + $0x58] sm:$0xff]
  %v1092 = vld [vmem:[%s3 + $0x60] sm:$0xff]
  %v1093 = vld [vmem:[%s3 + $0x68] sm:$0xff]
  %v1094 = vld [vmem:[%s3 + $0x70] sm:$0xff]
  %v1095 = vld [vmem:[%s3 + $0x78] sm:$0xff]
  %v1096 = vld [vmem:[%s4] sm:$0x1]
  %v1098 = vlaneseq
  %v1099 = vshrl.u32 %v1098, 7
  %v1100 = vsub.s32 0, %v1099
  %v1101 = vrot.slane %v1096, %v1100
  %v1104 = vsel %vm223, %v1072, 0
  %v1107 = vsel %vm223, %v1073, 0
  %v1110 = vsel %vm223, %v1074, 0
  %v1113 = vsel %vm223, %v1075, 0
  %v1116 = vsel %vm223, %v1076, 0
  %v1119 = vsel %vm223, %v1077, 0
  %v1122 = vsel %vm223, %v1078, 0
  %v1125 = vsel %vm223, %v1079, 0
  %v1128 = vsel %vm223, %v1080, 0
  %v1131 = vsel %vm223, %v1081, 0
  %v1134 = vsel %vm223, %v1082, 0
  %v1137 = vsel %vm223, %v1083, 0
  %v1140 = vsel %vm223, %v1084, 0
  %v1143 = vsel %vm223, %v1085, 0
  %v1146 = vsel %vm223, %v1086, 0
  %v1149 = vsel %vm223, %v1087, 0
  %v1152 = vsel %vm223, %v1088, 0
  %v1155 = vsel %vm223, %v1089, 0
  %v1158 = vsel %vm223, %v1090, 0
  %v1161 = vsel %vm223, %v1091, 0
  %v1164 = vsel %vm223, %v1092, 0
  %v1167 = vsel %vm223, %v1093, 0
  %v1170 = vsel %vm223, %v1094, 0
  %v1173 = vsel %vm223, %v1095, 0
  %1175 = vmatprep.subr.mxu0 0.0
  %1176 = vmatpush1.xpose.msra.mxu0 %v1128
  %1177 = vmatprep.subr.mxu0 0.0
  %1178 = vmatpush1.xpose.msra.mxu0 %v1131
  %1179 = vmatprep.subr.mxu0 0.0
  %1180 = vmatpush1.xpose.msra.mxu0 %v1134
  %1181 = vmatprep.subr.mxu0 0.0
  %1182 = vmatpush1.xpose.msra.mxu0 %v1137
  %1183 = vmatprep.subr.mxu0 0.0
  %1184 = vmatpush1.xpose.msra.mxu0 %v1140
  %1185 = vmatprep.subr.mxu0 0.0
  %1186 = vmatpush1.xpose.msra.mxu0 %v1143
  %1187 = vmatprep.subr.mxu0 0.0
  %1188 = vmatpush1.xpose.msra.mxu0 %v1146
  %1189 = vmatprep.subr.mxu0 0.0
  %1190 = vmatpush1.xpose.msra.mxu0 %v1149
  %1191 = vmatprep.subr.mxu0 0.0
  %1192 = vmatpush1.xpose.msra.mxu0 %v1152
  %1193 = vmatprep.subr.mxu0 0.0
  %1194 = vmatpush1.xpose.msra.mxu0 %v1155
  %1195 = vmatprep.subr.mxu0 0.0
  %1196 = vmatpush1.xpose.msra.mxu0 %v1158
  %1197 = vmatprep.subr.mxu0 0.0
  %1198 = vmatpush1.xpose.msra.mxu0 %v1161
  %1199 = vmatprep.subr.mxu0 0.0
  %1200 = vmatpush1.xpose.msra.mxu0 %v1164
  %1201 = vmatprep.subr.mxu0 0.0
  %1202 = vmatpush1.xpose.msra.mxu0 %v1167
  %1203 = vmatprep.subr.mxu0 0.0
  %1204 = vmatpush1.xpose.msra.mxu0 %v1170
  %1205 = vmatprep.subr.mxu0 0.0
  %1206 = vmatpush1.xpose.msra.mxu0 %v1173
  %1207 = vmatprep.subr.mxu0 0.0
  %1208 = vmatpush1.xpose.msra.mxu0 0.0
  %1209 = vmatprep.subr.mxu0 0.0
  %1210 = vmatpush1.xpose.msra.mxu0 0.0
  %1211 = vmatprep.subr.mxu0 0.0
  %1212 = vmatpush1.xpose.msra.mxu0 0.0
  %1213 = vmatprep.subr.mxu0 0.0
  %1214 = vmatpush1.xpose.msra.mxu0 0.0
  %1215 = vmatprep.subr.mxu0 0.0
  %1216 = vmatpush1.xpose.msra.mxu0 0.0
  %1217 = vmatprep.subr.mxu0 0.0
  %1218 = vmatpush1.xpose.msra.mxu0 0.0
  %1219 = vmatprep.subr.mxu0 0.0
  %1220 = vmatpush1.xpose.msra.mxu0 0.0
  %1221 = vmatprep.subr.mxu0 0.0
  %1222 = vmatpush1.xpose.msra.mxu0 0.0
  %1223 = vmatprep.subr.mxu0 0.0
  %1224 = vmatpush1.xpose.msra.mxu0 0.0
  %1225 = vmatprep.subr.mxu0 0.0
  %1226 = vmatpush1.xpose.msra.mxu0 0.0
  %1227 = vmatprep.subr.mxu0 0.0
  %1228 = vmatpush1.xpose.msra.mxu0 0.0
  %1229 = vmatprep.subr.mxu0 0.0
  %1230 = vmatpush1.xpose.msra.mxu0 0.0
  %1231 = vmatprep.subr.mxu0 0.0
  %1232 = vmatpush1.xpose.msra.mxu0 0.0
  %1233 = vmatprep.subr.mxu0 0.0
  %1234 = vmatpush1.xpose.msra.mxu0 0.0
  %1235 = vmatprep.subr.mxu0 0.0
  %1236 = vmatpush1.xpose.msra.mxu0 0.0
  %1237 = vmatprep.subr.mxu0 0.0
  %1238 = vmatpush1.xpose.msra.mxu0 0.0
  %1239 = vmatprep.mubr.f32.mxu0 0.0
  %1240 = vmatmul.mubr.f32.gmra.mrb[0].mxu0 %v1104
  %v1241 = vpop.f32.mrb[0].mxu0
  %v1242 = vadd.f32 %v1101, %v1241
  %v1243 = vpop.f32.mrb[0].mxu0
  %1244 = vmatprep.mubr.f32.mxu0 0.0
  %1245 = vmatmul.mubr.f32.gmra.mrb[0].mxu0 %v1107
  %v1246 = vpop.f32.mrb[0].mxu0
  %v1247 = vadd.f32 %v1101, %v1246
  %v1248 = vpop.f32.mrb[0].mxu0
  %1249 = vmatprep.mubr.f32.mxu0 0.0
  %1250 = vmatmul.mubr.f32.gmra.mrb[0].mxu0 %v1110
  %v1251 = vpop.f32.mrb[0].mxu0
  %v1252 = vadd.f32 %v1101, %v1251
  %v1253 = vpop.f32.mrb[0].mxu0
  %1254 = vmatprep.mubr.f32.mxu0 0.0
  %1255 = vmatmul.mubr.f32.gmra.mrb[0].mxu0 %v1113
  %v1256 = vpop.f32.mrb[0].mxu0
  %v1257 = vadd.f32 %v1101, %v1256
  %v1258 = vpop.f32.mrb[0].mxu0
  %1259 = vmatprep.mubr.f32.mxu0 0.0
  %1260 = vmatmul.mubr.f32.gmra.mrb[0].mxu0 %v1116
  %v1261 = vpop.f32.mrb[0].mxu0
  %v1262 = vadd.f32 %v1101, %v1261
  %v1263 = vpop.f32.mrb[0].mxu0
  %1264 = vmatprep.mubr.f32.mxu0 0.0
  %1265 = vmatmul.mubr.f32.gmra.mrb[0].mxu0 %v1119
  %v1266 = vpop.f32.mrb[0].mxu0
  %v1267 = vadd.f32 %v1101, %v1266
  %v1268 = vpop.f32.mrb[0].mxu0
  %1269 = vmatprep.mubr.f32.mxu0 0.0
  %1270 = vmatmul.mubr.f32.gmra.mrb[0].mxu0 %v1122
  %v1271 = vpop.f32.mrb[0].mxu0
  %v1272 = vadd.f32 %v1101, %v1271
  %v1273 = vpop.f32.mrb[0].mxu0
  %1274 = vmatprep.mubr.f32.mxu0 0.0
  %1275 = vmatmul.mubr.f32.gmra.mrb[0].mxu0 %v1125
  %v1276 = vpop.f32.mrb[0].mxu0
  %v1277 = vadd.f32 %v1101, %v1276
  %v1278 = vpop.f32.mrb[0].mxu0
  %1279 = vdwg.mxu0
  %1280 = vst [vmem:[%s7] sm:$0xff] %v1242
  %1281 = vst [vmem:[%s7 + $0x8] sm:$0xff] %v1247
  %1282 = vst [vmem:[%s7 + $0x10] sm:$0xff] %v1252
  %1283 = vst [vmem:[%s7 + $0x18] sm:$0xff] %v1257
  %1284 = vst [vmem:[%s7 + $0x20] sm:$0xff] %v1262
  %1285 = vst [vmem:[%s7 + $0x28] sm:$0xff] %v1267
  %1286 = vst [vmem:[%s7 + $0x30] sm:$0xff] %v1272
  %1287 = vst [vmem:[%s7 + $0x38] sm:$0xff] %v1277
  // Predicated region
  $region30: #{rnn_model_forward.1} parent=0 // pred_check
    _
  $region31: #{rnn_model_forward.1} parent=0 // pred_check_branch
    %1289 = sbr.rel (0) target = $region33
  $region32: #{rnn_model_forward.1} parent=0 // pred_region
    _
  $region33: #{rnn_model_forward.1} parent=0 // pred_fallthru
    _
  // Predicated region
  $region34: #{rnn_model_forward.1} parent=0 // pred_check
    _
  $region35: #{rnn_model_forward.1} parent=0 // pred_check_branch
    %1291 = sbr.rel (0) target = $region37
  $region36: #{rnn_model_forward.1} parent=0 // pred_region
    _
  $region37: #{rnn_model_forward.1} parent=0 // pred_fallthru
    _
  // Predicated region
  $region38: #{rnn_model_forward.1} parent=0 // pred_check
    _
  $region39: #{rnn_model_forward.1} parent=0 // pred_check_branch
    %1293 = sbr.rel (0) target = $region41
  $region40: #{rnn_model_forward.1} parent=0 // pred_region
    _
  $region41: #{rnn_model_forward.1} parent=0 // pred_fallthru
    _
  // Predicated region
  $region42: #{rnn_model_forward.1} parent=0 // pred_check
    _
  $region43: #{rnn_model_forward.1} parent=0 // pred_check_branch
    %1295 = sbr.rel (0) target = $region45
  $region44: #{rnn_model_forward.1} parent=0 // pred_region
    _
  $region45: #{rnn_model_forward.1} parent=0 // pred_fallthru
    _
  // Predicated region
  $region46: #{rnn_model_forward.1} parent=0 // pred_check
    _
  $region47: #{rnn_model_forward.1} parent=0 // pred_check_branch
    %1297 = sbr.rel (0) target = $region49
  $region48: #{rnn_model_forward.1} parent=0 // pred_region
    _
  $region49: #{rnn_model_forward.1} parent=0 // pred_fallthru
    _
  // Predicated region
  $region50: #{rnn_model_forward.1} parent=0 // pred_check
    _
  $region51: #{rnn_model_forward.1} parent=0 // pred_check_branch
    %1299 = sbr.rel (0) target = $region53
  $region52: #{rnn_model_forward.1} parent=0 // pred_region
    _
  $region53: #{rnn_model_forward.1} parent=0 // pred_fallthru
    _

</llo_original>
